<compile_context>
chip_gen: v7x
topology: tpu7x:2x2x1
jax: 0.10.0
libtpu: 0.0.40
codegen_flags: <defaults>
</compile_context>

<pallas_src>
import jax
import jax.numpy as jnp
from jax import lax
from jax.experimental import pallas as pl
from jax.experimental.pallas import tpu as pltpu


def _round_up(x, m):
    return ((x + m - 1) // m) * m


def _pick_tile(hw_pad, target):
    """Largest multiple of 128 that divides hw_pad and is <= target."""
    t = max(128, (min(target, hw_pad) // 128) * 128)
    while t > 128 and hw_pad % t != 0:
        t -= 128
    return t


def _device_kind():
    try:
        return jax.devices()[0].device_kind.lower()
    except Exception:  # pragma: no cover
        return ""


def _const_spec(shape, single_buffer):
    """BlockSpec for a grid-invariant (weight) input."""
    idx = lambda *args: (0,) * len(shape)
    if single_buffer:
        # The block never changes across the grid: one pipeline buffer suffices.
        return pl.BlockSpec(shape, idx, pipeline_mode=pl.Buffered(1))
    return pl.BlockSpec(shape, idx)


# --------------------------------------------------------------------------
# Kernel 1: fused Q/K/V 1x1-conv projection (run once per image).
# --------------------------------------------------------------------------
def _make_proj_kernel(dk_p, c_p):
    def proj_kernel(x_ref, w_ref, q_ref, k_ref, v_ref):
        x = x_ref[...]                                            # (ca, tp) bf16
        q_ref[...] = jnp.dot(w_ref[0:dk_p, :], x,
                             preferred_element_type=jnp.float32).astype(jnp.bfloat16)
        k_ref[...] = jnp.dot(w_ref[dk_p:2 * dk_p, :], x,
                             preferred_element_type=jnp.float32).astype(jnp.bfloat16)
        v_ref[...] = jnp.dot(w_ref[2 * dk_p:2 * dk_p + c_p, :], x,
                             preferred_element_type=jnp.float32).astype(jnp.bfloat16)
    return proj_kernel


def _project_qkv(x_aug, w_qkv, dk_p, c_p, tp, *, single_buffer, vmem_limit):
    B, ca, hw_pad = x_aug.shape
    n_p = hw_pad // tp
    return pl.pallas_call(
        _make_proj_kernel(dk_p, c_p),
        out_shape=(jax.ShapeDtypeStruct((B, dk_p, hw_pad), jnp.bfloat16),
                   jax.ShapeDtypeStruct((B, dk_p, hw_pad), jnp.bfloat16),
                   jax.ShapeDtypeStruct((B, c_p, hw_pad), jnp.bfloat16)),
        grid_spec=pltpu.PrefetchScalarGridSpec(
            num_scalar_prefetch=0,
            grid=(B, n_p),
            in_specs=[
                pl.BlockSpec((None, ca, tp), lambda b, i: (b, 0, i)),
                _const_spec((2 * dk_p + c_p, ca), single_buffer),
            ],
            out_specs=[
                pl.BlockSpec((None, dk_p, tp), lambda b, i: (b, 0, i)),
                pl.BlockSpec((None, dk_p, tp), lambda b, i: (b, 0, i)),
                pl.BlockSpec((None, c_p, tp), lambda b, i: (b, 0, i)),
            ]),
        compiler_params=pltpu.CompilerParams(
            dimension_semantics=("parallel", "parallel"),
            vmem_limit_bytes=vmem_limit),
    )(x_aug, w_qkv)


# --------------------------------------------------------------------------
# Kernel 2: flash-style attention + fused output 1x1 conv.
# --------------------------------------------------------------------------
def _make_flash_kernel(hw, tk, softmax_bf16, mask_keys):
    def kernel(q_ref, k_ref, v_ref, wo_ref, bo_ref, o_ref, m_sc, l_sc, acc_sc):
        ki = pl.program_id(2)

        @pl.when(ki == 0)
        def _init():
            m_sc[...] = jnp.full(m_sc.shape, -jnp.inf, m_sc.dtype)
            l_sc[...] = jnp.zeros(l_sc.shape, l_sc.dtype)
            acc_sc[...] = jnp.zeros(acc_sc.shape, acc_sc.dtype)

        q = q_ref[...]                                            # (dk_p, tq) bf16
        k = k_ref[...]                                            # (dk_p, tk) bf16
        v = v_ref[...]                                            # (c_p,  tk) bf16

        # Scores: contract dk; the (tq, tk) block is never the transposed
        # operand of any dot.  No 1/sqrt(dk) scaling (matches reference).
        s = lax.dot_general(q, k, (((0,), (0,)), ((), ())),
                            preferred_element_type=jnp.float32)   # (tq, tk) f32
        if mask_keys:
            # Mask padded key columns (HW padded up to a lane multiple).
            col = ki * tk + lax.broadcasted_iota(jnp.int32, s.shape, 1)
            s = jnp.where(col < hw, s, -jnp.inf)

        # Online softmax: max subtraction stays in f32.
        m_prev = m_sc[...]
        m_new = jnp.maximum(m_prev, jnp.max(s, axis=-1, keepdims=True))
        alpha = jnp.exp(m_prev - m_new)                           # (tq, 1) f32

        if softmax_bf16:
            # bf16 exp on the dominant (tq, tk) stream (v6e/v7x bf16 EUP/VPU).
            p = jnp.exp((s - m_new).astype(jnp.bfloat16))         # (tq, tk) bf16
            l_sc[...] = alpha * l_sc[...] + jnp.sum(
                p, axis=-1, keepdims=True, dtype=jnp.float32)
            pv = lax.dot_general(p, v, (((1,), (1,)), ((), ())),
                                 preferred_element_type=jnp.float32)  # (tq, c_p)
        else:
            # v5-and-older: no bf16 EUP/VPU — keep exp in f32.
            p = jnp.exp(s - m_new)
            l_sc[...] = alpha * l_sc[...] + jnp.sum(p, axis=-1, keepdims=True)
            pv = lax.dot_general(p.astype(jnp.bfloat16), v,
                                 (((1,), (1,)), ((), ())),
                                 preferred_element_type=jnp.float32)

        acc_sc[...] = alpha * acc_sc[...] + pv
        m_sc[...] = m_new

        @pl.when(ki == pl.num_programs(2) - 1)
        def _finish():
            inv_l = pl.reciprocal(l_sc[...], approx=True)         # (tq, 1)
            att = (acc_sc[...] * inv_l).astype(jnp.bfloat16)      # (tq, c_p)
            # out (C, tq) = Wo @ att^T (transposes only the small att operand)
            out = lax.dot_general(wo_ref[...], att, (((1,), (1,)), ((), ())),
                                  preferred_element_type=jnp.float32)
            o_ref[...] = (out + bo_ref[...]).astype(o_ref.dtype)

    return kernel


def _flash_attention(q, k, v, wo_p, bo_col, out_dtype, hw, tq, tk, *,
                     softmax_bf16, single_buffer, vmem_limit):
    B, dk_p, hw_pad = q.shape
    c_p = v.shape[1]
    C = wo_p.shape[0]
    n_q, n_k = hw_pad // tq, hw_pad // tk
    mask_keys = hw_pad != hw
    return pl.pallas_call(
        _make_flash_kernel(hw, tk, softmax_bf16, mask_keys),
        out_shape=jax.ShapeDtypeStruct((B, C, hw_pad), out_dtype),
        grid_spec=pltpu.PrefetchScalarGridSpec(
            num_scalar_prefetch=0,
            grid=(B, n_q, n_k),
            in_specs=[
                pl.BlockSpec((None, dk_p, tq), lambda b, qi, ki: (b, 0, qi)),
                pl.BlockSpec((None, dk_p, tk), lambda b, qi, ki: (b, 0, ki)),
                pl.BlockSpec((None, c_p, tk), lambda b, qi, ki: (b, 0, ki)),
                _const_spec((C, c_p), single_buffer),
                _const_spec((C, 1), single_buffer),
            ],
            out_specs=pl.BlockSpec((None, C, tq), lambda b, qi, ki: (b, 0, qi)),
            scratch_shapes=[
                pltpu.VMEM((tq, 1), jnp.float32),    # running max
                pltpu.VMEM((tq, 1), jnp.float32),    # running sum
                pltpu.VMEM((tq, c_p), jnp.float32),  # output accumulator
            ]),
        compiler_params=pltpu.CompilerParams(
            dimension_semantics=("parallel", "parallel", "arbitrary"),
            vmem_limit_bytes=vmem_limit),
    )(q, k, v, wo_p, bo_col)


# --------------------------------------------------------------------------
# Wrapper
# --------------------------------------------------------------------------
def multihead_attention_forward(x, params, num_heads, *, tq=None, tk=None):
    assert num_heads == 1, "reference module's forward only works for num_heads == 1"
    B, C, H, W = x.shape
    HW = H * W
    dk = C // num_heads
    wq, bq, wk, bk, wv, bv, wo, bo = params

    kind = _device_kind()
    is_older_gen = any(g in kind for g in ("v2", "v3", "v4", "v5"))
    is_v7 = ("v7" in kind) or ("7x" in kind)
    softmax_bf16 = not is_older_gen                 # bf16 EUP/VPU: v6e / v7x only
    vmem_limit = (48 if is_v7 else 64) * 1024 * 1024

    # Channel dims padded to the bf16 sublane quantum (16).
    dk_p = _round_up(dk, 16)
    c_p = _round_up(C, 16)
    ca = _round_up(C + 1, 16)          # channels + ones row (bias fold) + zero pad

    # Spatial axis padded to a lane multiple; padded key columns get masked.
    hw_pad = _round_up(HW, 128)

    # Augmented input: rows [:C] = x, row C = ones (bias fold), rest zeros.
    x_flat = x.reshape(B, C, HW)
    if hw_pad > HW:
        x_flat = jnp.pad(x_flat, ((0, 0), (0, 0), (0, hw_pad - HW)))
    parts = [x_flat, jnp.ones((B, 1, hw_pad), x_flat.dtype)]
    if ca > C + 1:
        parts.append(jnp.zeros((B, ca - (C + 1), hw_pad), x_flat.dtype))
    x_aug = jnp.concatenate(parts, axis=1).astype(jnp.bfloat16)   # (B, Ca, hw_pad)

    def pad_w(w, b, rows):
        out_c = w.shape[0]
        wp = jnp.zeros((rows, ca), jnp.float32)
        wp = wp.at[:out_c, :C].set(w.astype(jnp.float32))
        wp = wp.at[:out_c, C].set(b[:, 0].astype(jnp.float32))    # bias column
        return wp

    # Fused QKV projection weight: padded, biases folded, cast to bf16 ONCE here.
    w_qkv = jnp.concatenate([pad_w(wq, bq, dk_p),
                             pad_w(wk, bk, dk_p),
                             pad_w(wv, bv, c_p)], axis=0).astype(jnp.bfloat16)

    # Output 1x1 conv weight padded on the contraction dim; bias kept f32.
    wo_p = jnp.zeros((C, c_p), jnp.float32).at[:, :C].set(
        wo.astype(jnp.float32)).astype(jnp.bfloat16)              # (C, c_p)
    bo_col = bo.astype(jnp.float32)                               # (C, 1)

    # Generation-dependent tile defaults: v7x (64 MiB VMEM) stays at 512,
    # v5e/v6e (128 MiB) can stream bigger key tiles.
    if tq is None:
        tq = 512
    if tk is None:
        tk = 512 if is_v7 else 1024
    tq = _pick_tile(hw_pad, tq)
    tk = _pick_tile(hw_pad, tk)
    if is_v7:
        # Keep the megacore-parallel extent (B * n_q) even so both cores work.
        while (B * (hw_pad // tq)) % 2 != 0 and tq > 128:
            tq = _pick_tile(hw_pad, tq // 2)
    tp = _pick_tile(hw_pad, 512)        # projection tile

    def run(single_buffer):
        q, k, v = _project_qkv(x_aug, w_qkv, dk_p, c_p, tp,
                               single_buffer=single_buffer, vmem_limit=vmem_limit)
        return _flash_attention(q, k, v, wo_p, bo_col, x.dtype, HW, tq, tk,
                                softmax_bf16=softmax_bf16,
                                single_buffer=single_buffer,
                                vmem_limit=vmem_limit)

    try:
        out = run(True)
    except Exception:
        # Single-buffering constant weights (pl.Buffered(1)) is an optional
        # VMEM optimization; fall back to default double buffering if rejected.
        out = run(False)

    return out[:, :, :HW].reshape(B, C, H, W)


# --------------------------------------------------------------------------
# Parameters & plain-JAX reference
# --------------------------------------------------------------------------
def init_params(key, in_channels, num_heads):
    """Deterministic synthetic parameters.  Conv2d 1x1 weights stored as
    (out_c, in_c); biases as (out_c, 1)."""
    dk = in_channels // num_heads
    ks = jax.random.split(key, 8)
    s = 0.1
    wq = jax.random.normal(ks[0], (dk, in_channels), jnp.float32) * s
    bq = jax.random.normal(ks[1], (dk, 1), jnp.float32) * s
    wk = jax.random.normal(ks[2], (dk, in_channels), jnp.float32) * s
    bk = jax.random.normal(ks[3], (dk, 1), jnp.float32) * s
    wv = jax.random.normal(ks[4], (in_channels, in_channels), jnp.float32) * s
    bv = jax.random.normal(ks[5], (in_channels, 1), jnp.float32) * s
    wo = jax.random.normal(ks[6], (in_channels, in_channels), jnp.float32) * s
    bo = jax.random.normal(ks[7], (in_channels, 1), jnp.float32) * s
    return (wq, bq, wk, bk, wv, bv, wo, bo)


def reference_forward(x, params):
    """Plain-JAX f32 mirror of the PyTorch forward (num_heads == 1)."""
    wq, bq, wk, bk, wv, bv, wo, bo = params
    B, C, H, W = x.shape
    HW = H * W
    xf = x.reshape(B, C, HW)
    q = jnp.einsum('oc,bch->boh', wq, xf) + bq[None]
    k = jnp.einsum('oc,bch->boh', wk, xf) + bk[None]
    v = jnp.einsum('oc,bch->boh', wv, xf) + bv[None]
    scores = jnp.einsum('bdi,bdj->bij', q, k)             # queries @ keys (no scaling)
    attn = jax.nn.softmax(scores, axis=-1)
    att_out = jnp.einsum('bcj,bij->bci', v, attn)         # V @ A^T
    out = jnp.einsum('oc,bch->boh', wo, att_out) + bo[None]
    return out.reshape(B, C, H, W)


if __name__ == "__main__":
    B, C, H, W = 2, 4, 16, 16
    num_heads = 1

    key = jax.random.PRNGKey(0)
    kx, kp = jax.random.split(key)
    x = jax.random.normal(kx, (B, C, H, W), jnp.float32)
    params = init_params(kp, C, num_heads)

    # tq=tk=128 so the HW=256 demo exercises the multi-block flash path
    # (grid = (2, 2, 2)); real workloads use the larger generation defaults.
    out = multihead_attention_forward(x, params, num_heads, tq=128, tk=128)
    out = jax.block_until_ready(out)

    ref = reference_forward(x, params)
    assert out.shape == (B, C, H, W)
    max_err = float(jnp.max(jnp.abs(out - ref)))
    # bf16 MXU operands / bf16 exp (f32 accumulation) -> bf16-level tolerance.
    assert jnp.allclose(out, ref, atol=2e-2, rtol=2e-2), \
        f"mismatch vs reference, max abs err {max_err}"

    print("KERNEL_OK")
</pallas_src>

<mosaic_0001>
module attributes {stable_mosaic.version = 11 : i64} {
  func.func @proj_kernel(%arg0: i32, %arg1: i32, %arg2: memref<1x16x256xbf16, #tpu.memory_space<vmem>>, %arg3: memref<48x16xbf16, #tpu.memory_space<vmem>>, %arg4: memref<1x16x256xbf16, #tpu.memory_space<vmem>>, %arg5: memref<1x16x256xbf16, #tpu.memory_space<vmem>>, %arg6: memref<1x16x256xbf16, #tpu.memory_space<vmem>>) attributes {dimension_semantics = [#tpu.dimension_semantics<parallel>, #tpu.dimension_semantics<parallel>], iteration_bounds = array<i64: 2, 1>, scalar_prefetch = 0 : i64, scratch_operands = 0 : i64, tpu.core_type = #tpu.core_type<tc>, window_params = [{transform_indices = @transform_0, window_bounds = array<i64: 1, 16, 256>}, {pipeline_mode = #tpu.pipeline_mode<synchronous>, transform_indices = @transform_1, window_bounds = array<i64: 48, 16>}, {transform_indices = @transform_2, window_bounds = array<i64: 1, 16, 256>}, {transform_indices = @transform_3, window_bounds = array<i64: 1, 16, 256>}, {transform_indices = @transform_4, window_bounds = array<i64: 1, 16, 256>}]} {
    %c0 = arith.constant 0 : index
    %c0_0 = arith.constant 0 : index
    %c0_1 = arith.constant 0 : index
    %0 = vector.load %arg2[%c0, %c0_0, %c0_1] : memref<1x16x256xbf16, #tpu.memory_space<vmem>>, vector<1x16x256xbf16>
    %1 = vector.shape_cast %0 : vector<1x16x256xbf16> to vector<16x256xbf16>
    %c0_2 = arith.constant 0 : index
    %c0_3 = arith.constant 0 : index
    %2 = vector.load %arg3[%c0_2, %c0_3] : memref<48x16xbf16, #tpu.memory_space<vmem>>, vector<16x16xbf16>
    %cst = arith.constant dense<0.000000e+00> : vector<16x256xf32>
    %3 = tpu.matmul %2, %1, %cst {dimension_numbers = #tpu.dot_dimension_numbers<[1], [0], [0], [1], [0, 0, 1, 1], [], []>} : vector<16x16xbf16>, vector<16x256xbf16>, vector<16x256xf32> -> vector<16x256xf32>
    %4 = arith.truncf %3 : vector<16x256xf32> to vector<16x256xbf16>
    %c0_4 = arith.constant 0 : index
    %c0_5 = arith.constant 0 : index
    %c0_6 = arith.constant 0 : index
    %5 = vector.load %arg4[%c0_4, %c0_5, %c0_6] : memref<1x16x256xbf16, #tpu.memory_space<vmem>>, vector<1x16x256xbf16>
    %6 = vector.shape_cast %5 : vector<1x16x256xbf16> to vector<16x256xbf16>
    %7 = vector.shape_cast %4 : vector<16x256xbf16> to vector<1x16x256xbf16>
    tpu.vector_store %arg4[%c0_4, %c0_5, %c0_6], %7 {strides = array<i32>} : memref<1x16x256xbf16, #tpu.memory_space<vmem>>, vector<1x16x256xbf16>,
    %c16 = arith.constant 16 : index
    %c0_7 = arith.constant 0 : index
    %8 = vector.load %arg3[%c16, %c0_7] : memref<48x16xbf16, #tpu.memory_space<vmem>>, vector<16x16xbf16>
    %cst_8 = arith.constant dense<0.000000e+00> : vector<16x256xf32>
    %9 = tpu.matmul %8, %1, %cst_8 {dimension_numbers = #tpu.dot_dimension_numbers<[1], [0], [0], [1], [0, 0, 1, 1], [], []>} : vector<16x16xbf16>, vector<16x256xbf16>, vector<16x256xf32> -> vector<16x256xf32>
    %10 = arith.truncf %9 : vector<16x256xf32> to vector<16x256xbf16>
    %c0_9 = arith.constant 0 : index
    %c0_10 = arith.constant 0 : index
    %c0_11 = arith.constant 0 : index
    %11 = vector.load %arg5[%c0_9, %c0_10, %c0_11] : memref<1x16x256xbf16, #tpu.memory_space<vmem>>, vector<1x16x256xbf16>
    %12 = vector.shape_cast %11 : vector<1x16x256xbf16> to vector<16x256xbf16>
    %13 = vector.shape_cast %10 : vector<16x256xbf16> to vector<1x16x256xbf16>
    tpu.vector_store %arg5[%c0_9, %c0_10, %c0_11], %13 {strides = array<i32>} : memref<1x16x256xbf16, #tpu.memory_space<vmem>>, vector<1x16x256xbf16>,
    %c32 = arith.constant 32 : index
    %c0_12 = arith.constant 0 : index
    %14 = vector.load %arg3[%c32, %c0_12] : memref<48x16xbf16, #tpu.memory_space<vmem>>, vector<16x16xbf16>
    %cst_13 = arith.constant dense<0.000000e+00> : vector<16x256xf32>
    %15 = tpu.matmul %14, %1, %cst_13 {dimension_numbers = #tpu.dot_dimension_numbers<[1], [0], [0], [1], [0, 0, 1, 1], [], []>} : vector<16x16xbf16>, vector<16x256xbf16>, vector<16x256xf32> -> vector<16x256xf32>
    %16 = arith.truncf %15 : vector<16x256xf32> to vector<16x256xbf16>
    %c0_14 = arith.constant 0 : index
    %c0_15 = arith.constant 0 : index
    %c0_16 = arith.constant 0 : index
    %17 = vector.load %arg6[%c0_14, %c0_15, %c0_16] : memref<1x16x256xbf16, #tpu.memory_space<vmem>>, vector<1x16x256xbf16>
    %18 = vector.shape_cast %17 : vector<1x16x256xbf16> to vector<16x256xbf16>
    %19 = vector.shape_cast %16 : vector<16x256xbf16> to vector<1x16x256xbf16>
    tpu.vector_store %arg6[%c0_14, %c0_15, %c0_16], %19 {strides = array<i32>} : memref<1x16x256xbf16, #tpu.memory_space<vmem>>, vector<1x16x256xbf16>,
    return
  }
  func.func @transform_0(%arg0: i32, %arg1: i32) -> (i32, i32, i32) {
    %c0_i32 = arith.constant 0 : i32
    %c0_i32_0 = arith.constant 0 : i32
    return %arg0, %c0_i32, %arg1 : i32, i32, i32
  }
  func.func @transform_1(%arg0: i32, %arg1: i32) -> (i32, i32) {
    %c0_i32 = arith.constant 0 : i32
    %c0_i32_0 = arith.constant 0 : i32
    %c0_i32_1 = arith.constant 0 : i32
    return %c0_i32, %c0_i32_0 : i32, i32
  }
  func.func @transform_2(%arg0: i32, %arg1: i32) -> (i32, i32, i32) {
    %c0_i32 = arith.constant 0 : i32
    %c0_i32_0 = arith.constant 0 : i32
    return %arg0, %c0_i32, %arg1 : i32, i32, i32
  }
  func.func @transform_3(%arg0: i32, %arg1: i32) -> (i32, i32, i32) {
    %c0_i32 = arith.constant 0 : i32
    %c0_i32_0 = arith.constant 0 : i32
    return %arg0, %c0_i32, %arg1 : i32, i32, i32
  }
  func.func @transform_4(%arg0: i32, %arg1: i32) -> (i32, i32, i32) {
    %c0_i32 = arith.constant 0 : i32
    %c0_i32_0 = arith.constant 0 : i32
    return %arg0, %c0_i32, %arg1 : i32, i32, i32
  }
}

module attributes {stable_mosaic.version = 11 : i64} {
  func.func @proj_kernel(%arg0: i32, %arg1: i32, %arg2: memref<1x16x256xbf16, #tpu.memory_space<vmem>>, %arg3: memref<48x16xbf16, #tpu.memory_space<vmem>>, %arg4: memref<1x16x256xbf16, #tpu.memory_space<vmem>>, %arg5: memref<1x16x256xbf16, #tpu.memory_space<vmem>>, %arg6: memref<1x16x256xbf16, #tpu.memory_space<vmem>>) attributes {dimension_semantics = [#tpu.dimension_semantics<parallel>, #tpu.dimension_semantics<parallel>], iteration_bounds = array<i64: 2, 1>, scalar_prefetch = 0 : i64, scratch_operands = 0 : i64, tpu.core_type = #tpu.core_type<tc>, window_params = [{transform_indices = @transform_0, window_bounds = array<i64: 1, 16, 256>}, {pipeline_mode = #tpu.pipeline_mode<synchronous>, transform_indices = @transform_1, window_bounds = array<i64: 48, 16>}, {transform_indices = @transform_2, window_bounds = array<i64: 1, 16, 256>}, {transform_indices = @transform_3, window_bounds = array<i64: 1, 16, 256>}, {transform_indices = @transform_4, window_bounds = array<i64: 1, 16, 256>}]} {
    %c0 = arith.constant 0 : index
    %c0_0 = arith.constant 0 : index
    %c0_1 = arith.constant 0 : index
    %0 = vector.load %arg2[%c0, %c0_0, %c0_1] : memref<1x16x256xbf16, #tpu.memory_space<vmem>>, vector<1x16x256xbf16>
    %1 = vector.shape_cast %0 : vector<1x16x256xbf16> to vector<16x256xbf16>
    %c0_2 = arith.constant 0 : index
    %c0_3 = arith.constant 0 : index
    %2 = vector.load %arg3[%c0_2, %c0_3] : memref<48x16xbf16, #tpu.memory_space<vmem>>, vector<16x16xbf16>
    %cst = arith.constant dense<0.000000e+00> : vector<16x256xf32>
    %3 = tpu.matmul %2, %1, %cst {dimension_numbers = #tpu.dot_dimension_numbers<[1], [0], [0], [1], [0, 0, 1, 1], [], []>} : vector<16x16xbf16>, vector<16x256xbf16>, vector<16x256xf32> -> vector<16x256xf32>
    %4 = arith.truncf %3 : vector<16x256xf32> to vector<16x256xbf16>
    %c0_4 = arith.constant 0 : index
    %c0_5 = arith.constant 0 : index
    %c0_6 = arith.constant 0 : index
    %5 = vector.load %arg4[%c0_4, %c0_5, %c0_6] : memref<1x16x256xbf16, #tpu.memory_space<vmem>>, vector<1x16x256xbf16>
    %6 = vector.shape_cast %5 : vector<1x16x256xbf16> to vector<16x256xbf16>
    %7 = vector.shape_cast %4 : vector<16x256xbf16> to vector<1x16x256xbf16>
    tpu.vector_store %arg4[%c0_4, %c0_5, %c0_6], %7 {strides = array<i32>} : memref<1x16x256xbf16, #tpu.memory_space<vmem>>, vector<1x16x256xbf16>,
    %c16 = arith.constant 16 : index
    %c0_7 = arith.constant 0 : index
    %8 = vector.load %arg3[%c16, %c0_7] : memref<48x16xbf16, #tpu.memory_space<vmem>>, vector<16x16xbf16>
    %cst_8 = arith.constant dense<0.000000e+00> : vector<16x256xf32>
    %9 = tpu.matmul %8, %1, %cst_8 {dimension_numbers = #tpu.dot_dimension_numbers<[1], [0], [0], [1], [0, 0, 1, 1], [], []>} : vector<16x16xbf16>, vector<16x256xbf16>, vector<16x256xf32> -> vector<16x256xf32>
    %10 = arith.truncf %9 : vector<16x256xf32> to vector<16x256xbf16>
    %c0_9 = arith.constant 0 : index
    %c0_10 = arith.constant 0 : index
    %c0_11 = arith.constant 0 : index
    %11 = vector.load %arg5[%c0_9, %c0_10, %c0_11] : memref<1x16x256xbf16, #tpu.memory_space<vmem>>, vector<1x16x256xbf16>
    %12 = vector.shape_cast %11 : vector<1x16x256xbf16> to vector<16x256xbf16>
    %13 = vector.shape_cast %10 : vector<16x256xbf16> to vector<1x16x256xbf16>
    tpu.vector_store %arg5[%c0_9, %c0_10, %c0_11], %13 {strides = array<i32>} : memref<1x16x256xbf16, #tpu.memory_space<vmem>>, vector<1x16x256xbf16>,
    %c32 = arith.constant 32 : index
    %c0_12 = arith.constant 0 : index
    %14 = vector.load %arg3[%c32, %c0_12] : memref<48x16xbf16, #tpu.memory_space<vmem>>, vector<16x16xbf16>
    %cst_13 = arith.constant dense<0.000000e+00> : vector<16x256xf32>
    %15 = tpu.matmul %14, %1, %cst_13 {dimension_numbers = #tpu.dot_dimension_numbers<[1], [0], [0], [1], [0, 0, 1, 1], [], []>} : vector<16x16xbf16>, vector<16x256xbf16>, vector<16x256xf32> -> vector<16x256xf32>
    %16 = arith.truncf %15 : vector<16x256xf32> to vector<16x256xbf16>
    %c0_14 = arith.constant 0 : index
    %c0_15 = arith.constant 0 : index
    %c0_16 = arith.constant 0 : index
    %17 = vector.load %arg6[%c0_14, %c0_15, %c0_16] : memref<1x16x256xbf16, #tpu.memory_space<vmem>>, vector<1x16x256xbf16>
    %18 = vector.shape_cast %17 : vector<1x16x256xbf16> to vector<16x256xbf16>
    %19 = vector.shape_cast %16 : vector<16x256xbf16> to vector<1x16x256xbf16>
    tpu.vector_store %arg6[%c0_14, %c0_15, %c0_16], %19 {strides = array<i32>} : memref<1x16x256xbf16, #tpu.memory_space<vmem>>, vector<1x16x256xbf16>,
    return
  }
  func.func @transform_0(%arg0: i32, %arg1: i32) -> (i32, i32, i32) {
    %c0_i32 = arith.constant 0 : i32
    %c0_i32_0 = arith.constant 0 : i32
    return %arg0, %c0_i32, %arg1 : i32, i32, i32
  }
  func.func @transform_1(%arg0: i32, %arg1: i32) -> (i32, i32) {
    %c0_i32 = arith.constant 0 : i32
    %c0_i32_0 = arith.constant 0 : i32
    %c0_i32_1 = arith.constant 0 : i32
    return %c0_i32, %c0_i32_0 : i32, i32
  }
  func.func @transform_2(%arg0: i32, %arg1: i32) -> (i32, i32, i32) {
    %c0_i32 = arith.constant 0 : i32
    %c0_i32_0 = arith.constant 0 : i32
    return %arg0, %c0_i32, %arg1 : i32, i32, i32
  }
  func.func @transform_3(%arg0: i32, %arg1: i32) -> (i32, i32, i32) {
    %c0_i32 = arith.constant 0 : i32
    %c0_i32_0 = arith.constant 0 : i32
    return %arg0, %c0_i32, %arg1 : i32, i32, i32
  }
  func.func @transform_4(%arg0: i32, %arg1: i32) -> (i32, i32, i32) {
    %c0_i32 = arith.constant 0 : i32
    %c0_i32_0 = arith.constant 0 : i32
    return %arg0, %c0_i32, %arg1 : i32, i32, i32
  }
}

</mosaic_0001>

<llo_original>
// kernel: tpu_custom_call.1
$region0: #{tpu_custom_call.1}
  #allocation0 [shape = 'u32[]', space=smem, size = 0x4, offset = 0x4, fixed_abs, tag = 'smem constant byte address 0x4 - core index']
  #allocation1 [shape = 'u32[144,128]{1,0:T(1,128)}', space=vmem, size = 0x12000, scoped, tag = 'internal scratch']
  %s0 = inlined_call_operand.hbm [shape: bf16[2,16,256], index: 0, kind: input, shape index: {}]
  %s1 = inlined_call_operand.hbm [shape: bf16[48,16], index: 1, kind: input, shape index: {}]
  %s2 = inlined_call_operand.hbm [shape: bf16[2,16,256], index: 2, kind: output, shape index: {0}]
  %s3 = inlined_call_operand.hbm [shape: bf16[2,16,256], index: 3, kind: output, shape index: {1}]
  %s4 = inlined_call_operand.hbm [shape: bf16[2,16,256], index: 4, kind: output, shape index: {2}]
  %5 = xla_tuple %s2, %s3, %s4
  %s6 = sld [smem:[#allocation0]]
  $region65: #{tpu_custom_call.1} parent=0
    _
  %s8 = ssub.s32 1, %s6
  %s9 = scalar_select 0, %s8, %s6
  $region1: #{tpu_custom_call.1} parent=0
    #allocation2 [shape = 'u8[16384]{0}', space=vmem, size = 0x4000, scoped, tag = 'input window, operand 0']
    #allocation3 [shape = 's32[2]{0}', space=sflag, size = 0x8, scoped, tag = 'scoped memory for tpu_custom_call.1']
    #allocation4 [shape = 's32[2]{0}', space=sflag, size = 0x8, scoped, tag = 'scoped memory for tpu_custom_call.1']
    #allocation5 [shape = 'u8[12288]{0}', space=vmem, size = 0x3000, scoped, tag = 'input window, operand 1, single buffered']
    #allocation6 [shape = 's32[1]{0}', space=sflag, size = 0x4, scoped, tag = 'scoped memory for tpu_custom_call.1']
    #allocation7 [shape = 'u8[16384]{0}', space=vmem, size = 0x4000, scoped, tag = 'output window, operand 0']
    #allocation8 [shape = 'u8[16384]{0}', space=vmem, size = 0x4000, scoped, tag = 'output window, operand 1']
    #allocation9 [shape = 's32[2]{0}', space=sflag, size = 0x8, scoped, tag = 'scoped memory for tpu_custom_call.1']
    #allocation10 [shape = 'u8[16384]{0}', space=vmem, size = 0x4000, scoped, tag = 'output window, operand 2']
    %10 = vsyncpa [#allocation3], 0
    %s11 = scalar_lea.sflag [#allocation3], 1
    %12 = vsyncpa %s11, 0
    %13 = vsyncpa [#allocation6], 0
    %14 = vsyncpa [#allocation4], 0
    %s15 = scalar_lea.sflag [#allocation4], 1
    %16 = vsyncpa %s15, 0
    %17 = vsyncpa [#allocation9], 0
    %s18 = scalar_lea.sflag [#allocation9], 1
    %19 = vsyncpa %s18, 0
    loop: start=0, step=1, limit=4
    $region2: #{tpu_custom_call.1} parent=1 // loop_pre_header
      _
    $region3: #{tpu_custom_call.1} parent=1 // loop_header
      %s21 = sphi 0, %s25
      %p22 = scmp.ge.s32.totalorder %s21, 4
      %s28 = sphi 0, %s40
      %s29 = sphi 0, %s36
      %s30 = sphi 0, %s28
      %s31 = sphi 0, %s29
      %s32 = sphi 0, %s30
      %s33 = sphi 0, %s31
      %s45 = sphi 0, %s47
      %s48 = sphi 0, %s45
      %s49 = sphi 0, %s48
      %s65 = sphi 0, %s49
      %s69 = sphi 0, %s69
      %s71 = sphi 0, %s69
      %s72 = sphi 0, %s71
      %s86 = sphi 0, %s72
      %s94 = sphi 0, %s96
      %s97 = sphi 0, %s94
      %s98 = sphi 0, %s97
      %s114 = sphi 0, %s98
      %s122 = sphi 0, %s124
      %s125 = sphi 0, %s122
      %s126 = sphi 0, %s125
      %s142 = sphi 0, %s126
      %s150 = sphi 0, %s152
      %s153 = sphi 0, %s150
      %s154 = sphi 0, %s153
      %s170 = sphi 0, %s154
    $region4: #{tpu_custom_call.1} parent=1 // loop_header_branch
      %24 = sbr.rel (%p22) target = $region8
    $region5: #{tpu_custom_call.1} parent=1 // loop_body
      %s26 = ssub.s32 %s21, 1
      %s27 = ssub.s32 %s21, 2
      %s34 = sadd.s32 1, %s29
      %p35 = scmp.ge.s32.totalorder %s34, 1
      %s36 = scalar_select %p35, 0, %s34
      %s37 = sadd.s32 1, %s28
      %s38 = scalar_select %p35, %s37, %s28
      %p39 = scmp.ge.s32.totalorder %s38, 2
      %s40 = scalar_select %p39, 0, %s38
      %s41 = ssub.s32 %s28, %s40
      %s42 = ssub.s32 %s29, %s36
      %s43 = sor.u32 %s41, %s42
      %p44 = scmp.eq.s32.totalorder %s43, 0
      %s46 = sadd.s32 %s45, 1
      %s47 = scalar_select %p44, %s45, %s46
      %p50 = pneg %p44
      %p51 = scmp.eq.s32.totalorder %s21, 1
      %p52 = por %p50, %p51
      %p53 = scmp.ne.s32.totalorder %s45, %s48
      %p54 = scmp.eq.s32.totalorder %s21, 0
      %p55 = por %p53, %p54
      %p56 = scmp.ne.s32.totalorder %s45, %s48
      %p57 = scmp.eq.s32.totalorder %s26, 1
      %p58 = por %p56, %p57
      %p59 = scmp.ne.s32.totalorder %s48, %s49
      %p60 = scmp.eq.s32.totalorder %s26, 0
      %p61 = por %p59, %p60
      %p62 = scmp.ne.s32.totalorder %s48, %s49
      %p63 = scmp.eq.s32.totalorder %s27, 1
      %p64 = por %p62, %p63
      %p66 = scmp.ne.s32.totalorder %s49, %s65
      %p67 = scmp.eq.s32.totalorder %s27, 0
      %p68 = por %p66, %p67
      %s70 = sadd.s32 %s69, 1
      %p73 = scmp.eq.s32.totalorder %s21, 1
      %p74 = scmp.ne.s32.totalorder %s69, %s71
      %p75 = scmp.eq.s32.totalorder %s21, 0
      %p76 = por %p74, %p75
      %p77 = scmp.ne.s32.totalorder %s69, %s71
      %p78 = scmp.eq.s32.totalorder %s26, 1
      %p79 = por %p77, %p78
      %p80 = scmp.ne.s32.totalorder %s71, %s72
      %p81 = scmp.eq.s32.totalorder %s26, 0
      %p82 = por %p80, %p81
      %p83 = scmp.ne.s32.totalorder %s71, %s72
      %p84 = scmp.eq.s32.totalorder %s27, 1
      %p85 = por %p83, %p84
      %p87 = scmp.ne.s32.totalorder %s72, %s86
      %p88 = scmp.eq.s32.totalorder %s27, 0
      %p89 = por %p87, %p88
      %s90 = ssub.s32 %s28, %s40
      %s91 = ssub.s32 %s29, %s36
      %s92 = sor.u32 %s90, %s91
      %p93 = scmp.eq.s32.totalorder %s92, 0
      %s95 = sadd.s32 %s94, 1
      %s96 = scalar_select %p93, %s94, %s95
      %p99 = pneg %p93
      %p100 = scmp.eq.s32.totalorder %s21, 1
      %p101 = por %p99, %p100
      %p102 = scmp.ne.s32.totalorder %s94, %s97
      %p103 = scmp.eq.s32.totalorder %s21, 0
      %p104 = por %p102, %p103
      %p105 = scmp.ne.s32.totalorder %s94, %s97
      %p106 = scmp.eq.s32.totalorder %s26, 1
      %p107 = por %p105, %p106
      %p108 = scmp.ne.s32.totalorder %s97, %s98
      %p109 = scmp.eq.s32.totalorder %s26, 0
      %p110 = por %p108, %p109
      %p111 = scmp.ne.s32.totalorder %s97, %s98
      %p112 = scmp.eq.s32.totalorder %s27, 1
      %p113 = por %p111, %p112
      %p115 = scmp.ne.s32.totalorder %s98, %s114
      %p116 = scmp.eq.s32.totalorder %s27, 0
      %p117 = por %p115, %p116
      %s118 = ssub.s32 %s28, %s40
      %s119 = ssub.s32 %s29, %s36
      %s120 = sor.u32 %s118, %s119
      %p121 = scmp.eq.s32.totalorder %s120, 0
      %s123 = sadd.s32 %s122, 1
      %s124 = scalar_select %p121, %s122, %s123
      %p127 = pneg %p121
      %p128 = scmp.eq.s32.totalorder %s21, 1
      %p129 = por %p127, %p128
      %p130 = scmp.ne.s32.totalorder %s122, %s125
      %p131 = scmp.eq.s32.totalorder %s21, 0
      %p132 = por %p130, %p131
      %p133 = scmp.ne.s32.totalorder %s122, %s125
      %p134 = scmp.eq.s32.totalorder %s26, 1
      %p135 = por %p133, %p134
      %p136 = scmp.ne.s32.totalorder %s125, %s126
      %p137 = scmp.eq.s32.totalorder %s26, 0
      %p138 = por %p136, %p137
      %p139 = scmp.ne.s32.totalorder %s125, %s126
      %p140 = scmp.eq.s32.totalorder %s27, 1
      %p141 = por %p139, %p140
      %p143 = scmp.ne.s32.totalorder %s126, %s142
      %p144 = scmp.eq.s32.totalorder %s27, 0
      %p145 = por %p143, %p144
      %s146 = ssub.s32 %s28, %s40
      %s147 = ssub.s32 %s29, %s36
      %s148 = sor.u32 %s146, %s147
      %p149 = scmp.eq.s32.totalorder %s148, 0
      %s151 = sadd.s32 %s150, 1
      %s152 = scalar_select %p149, %s150, %s151
      %p155 = pneg %p149
      %p156 = scmp.eq.s32.totalorder %s21, 1
      %p157 = por %p155, %p156
      %p158 = scmp.ne.s32.totalorder %s150, %s153
      %p159 = scmp.eq.s32.totalorder %s21, 0
      %p160 = por %p158, %p159
      %p161 = scmp.ne.s32.totalorder %s150, %s153
      %p162 = scmp.eq.s32.totalorder %s26, 1
      %p163 = por %p161, %p162
      %p164 = scmp.ne.s32.totalorder %s153, %s154
      %p165 = scmp.eq.s32.totalorder %s26, 0
      %p166 = por %p164, %p165
      %p167 = scmp.ne.s32.totalorder %s153, %s154
      %p168 = scmp.eq.s32.totalorder %s27, 1
      %p169 = por %p167, %p168
      %p171 = scmp.ne.s32.totalorder %s154, %s170
      %p172 = scmp.eq.s32.totalorder %s27, 0
      %p173 = por %p171, %p172
      %p174 = scmp.le.s32.totalorder 1, %s21
      %p175 = scmp.lt.s32.totalorder %s21, 3
      %p176 = pnand %p174, %p175
      %p177 = pneg %p176
      // Predicated region
      $region9: #{tpu_custom_call.1} parent=5 // pred_check
        _
      $region10: #{tpu_custom_call.1} parent=5 // pred_check_branch
        %179 = sbr.rel (%p176) target = $region12
      $region11: #{tpu_custom_call.1} parent=5 // pred_region
        %s180 = ssub.s32 %s21, 1
        // Predicated region
        $region13: #{tpu_custom_call.1} parent=11 // pred_check
          %p181 = pneg %p82
        $region14: #{tpu_custom_call.1} parent=11 // pred_check_branch
          %183 = sbr.rel (%p181) target = $region16
        $region15: #{tpu_custom_call.1} parent=11 // pred_region
          %s185 = ssub.s32 384, 384
          %186 = vsyncadd [#allocation6], %s185
          %s187 = sshll.u32 [#allocation5], 4
          %s188 = int_to_ptr.vmem [resolvable:$true] %s187
          %193 = dma.hbm_to_vmem [thread:$0]  %s1, 384, %s188, [#allocation6], 64, 64, 4
        $region16: #{tpu_custom_call.1} parent=11 // pred_fallthru
          _
      $region12: #{tpu_custom_call.1} parent=5 // pred_fallthru
        _
      %p194 = scmp.lt.s32.totalorder %s21, 2
      // Predicated region
      $region17: #{tpu_custom_call.1} parent=5 // pred_check
        %p195 = pneg %p194
      $region18: #{tpu_custom_call.1} parent=5 // pred_check_branch
        %197 = sbr.rel (%p195) target = $region20
      $region19: #{tpu_custom_call.1} parent=5 // pred_region
        // Predicated region
        $region21: #{tpu_custom_call.1} parent=19 // pred_check
          %p198 = pneg %p55
        $region22: #{tpu_custom_call.1} parent=19 // pred_check_branch
          %200 = sbr.rel (%p198) target = $region24
        $region23: #{tpu_custom_call.1} parent=19 // pred_region
          %s201 = sand.u32 %s45, 1
          %s202 = scalar_lea.sflag [#allocation3], %s201
          %s203 = sand.u32 %s45, 1
          %s204 = smul.addr %s203, 16
          %s205 = scalar_lea.vmem [#allocation2], %s204
          %s206 = smul.u32 2, %s29
          %s208 = ssub.s32 256, 256
          %209 = vsyncadd %s202, %s208
          %s210 = smul.addr %s28, 4
          %s211 = sadd.s32 %s206, %s210
          %s212 = smul.addr %s211, 64
          %s213 = scalar_lea.hbm %s0, %s212
          %s214 = sshll.u32 %s205, 4
          %s215 = int_to_ptr.vmem [resolvable:$true] %s214
          %220 = dma.hbm_to_vmem [thread:$0]  %s213, 256, %s215, %s202, 128, 128, 8
        $region24: #{tpu_custom_call.1} parent=19 // pred_fallthru
          _
      $region20: #{tpu_custom_call.1} parent=5 // pred_fallthru
        _
      %p221 = scmp.le.s32.totalorder 1, %s21
      %p222 = scmp.lt.s32.totalorder %s21, 3
      %p223 = pnand %p221, %p222
      %p224 = pneg %p223
      // Predicated region
      $region25: #{tpu_custom_call.1} parent=5 // pred_check
        _
      $region26: #{tpu_custom_call.1} parent=5 // pred_check_branch
        %226 = sbr.rel (%p223) target = $region28
      $region27: #{tpu_custom_call.1} parent=5 // pred_region
        %s227 = ssub.s32 %s21, 1
        %s228 = sand.u32 %s48, 1
        %s229 = scalar_lea.sflag [#allocation3], %s228
        %s230 = sand.u32 %s48, 1
        %s231 = smul.addr %s230, 16
        %s232 = scalar_lea.vmem [#allocation2], %s231
        // Predicated region
        $region29: #{tpu_custom_call.1} parent=27 // pred_check
          %p233 = pneg %p61
        $region30: #{tpu_custom_call.1} parent=27 // pred_check_branch
          %235 = sbr.rel (%p233) target = $region32
        $region31: #{tpu_custom_call.1} parent=27 // pred_region
          %236 = dma.done %s229, 256
        $region32: #{tpu_custom_call.1} parent=27 // pred_fallthru
          _
        // Predicated region
        $region33: #{tpu_custom_call.1} parent=27 // pred_check
          %p237 = pneg %p82
        $region34: #{tpu_custom_call.1} parent=27 // pred_check_branch
          %239 = sbr.rel (%p237) target = $region36
        $region35: #{tpu_custom_call.1} parent=27 // pred_region
          %240 = dma.done [#allocation6], 384
        $region36: #{tpu_custom_call.1} parent=27 // pred_fallthru
          _
        %s241 = sand.u32 %s48, 1
        %s242 = scalar_lea.sflag [#allocation3], %s241
        %s243 = sand.u32 %s48, 1
        %s244 = smul.addr %s243, 16
        %s245 = scalar_lea.vmem [#allocation2], %s244
        %p246 = pneg %p61
        %p247 = pneg %p58
        %p248 = pneg %p82
        %p249 = pneg %p79
        %p250 = pneg %p110
        %p251 = pneg %p107
        %s252 = sand.u32 %s97, 1
        %s253 = scalar_lea.sflag [#allocation4], %s252
        %s254 = sand.u32 %s97, 1
        %s255 = smul.addr %s254, 16
        %s256 = scalar_lea.vmem [#allocation7], %s255
        %p257 = pneg %p138
        %p258 = pneg %p135
        %s259 = sand.u32 %s26, 1
        %s260 = scalar_lea.sflag [#allocation9], %s259
        %s261 = sand.u32 %s125, 1
        %s262 = smul.addr %s261, 16
        %s263 = scalar_lea.vmem [#allocation8], %s262
        %p264 = pneg %p166
        %p265 = pneg %p163
        %s266 = sand.u32 %s26, 1
        %s267 = scalar_lea.sflag [#allocation9], %s266
        %s268 = sand.u32 %s153, 1
        %s269 = smul.addr %s268, 16
        %s270 = scalar_lea.vmem [#allocation10], %s269
        %s271 = smul.u32 2, %s31
        %s272 = smul.u32 2, %s31
        %s273 = smul.u32 2, %s31
        %s274 = smul.u32 2, %s31
        %v276 = vld [vmem:[%s232] sm:$0xff]
        %v277 = vld [vmem:[%s232 + $0x8] sm:$0xff]
        %v278 = vld [vmem:[#allocation5] sm:$0xf]
        %v279 = vld [vmem:[#allocation5 + $0x4] sm:$0xf]
        %v282 = vunpack.c.l.b16 %v278
        %v283 = vunpack.c.l.b16 %v279
        %v284 = vpack.c.b16 %v283, %v282
        %v287 = vunpack.c.l.b16 %v276
        %v288 = vunpack.c.h.b16 %v276
        %v289 = vunpack.c.l.b16 %v277
        %v290 = vunpack.c.h.b16 %v277
        %v291 = vpack.c.b16 %v289, %v287
        %v292 = vpack.c.b16 %v290, %v288
        %vm295 = vcmask 130048
        %v297 = vsel %vm295, %v284, 0
        %299 = vmatprep.subr.bf16.mxu0 %v292
        %300 = vmatpush1.bf16.msra.mxu0 %v291
        %301 = vmatprep.subr.bf16.mxu0 0
        %302 = vmatpush1.bf16.msra.mxu0 0
        %303 = vmatprep.subr.bf16.mxu0 0
        %304 = vmatpush1.bf16.msra.mxu0 0
        %305 = vmatprep.subr.bf16.mxu0 0
        %306 = vmatpush1.bf16.msra.mxu0 0
        %307 = vmatprep.subr.bf16.mxu0 0
        %308 = vmatpush1.bf16.msra.mxu0 0
        %309 = vmatprep.subr.bf16.mxu0 0
        %310 = vmatpush1.bf16.msra.mxu0 0
        %311 = vmatprep.subr.bf16.mxu0 0
        %312 = vmatpush1.bf16.msra.mxu0 0
        %313 = vmatprep.subr.bf16.mxu0 0
        %314 = vmatpush1.bf16.msra.mxu0 0
        %315 = vmatprep.subr.bf16.mxu0 0
        %316 = vmatpush1.bf16.msra.mxu0 0
        %317 = vmatprep.subr.bf16.mxu0 0
        %318 = vmatpush1.bf16.msra.mxu0 0
        %319 = vmatprep.subr.bf16.mxu0 0
        %320 = vmatpush1.bf16.msra.mxu0 0
        %321 = vmatprep.subr.bf16.mxu0 0
        %322 = vmatpush1.bf16.msra.mxu0 0
        %323 = vmatprep.subr.bf16.mxu0 0
        %324 = vmatpush1.bf16.msra.mxu0 0
        %325 = vmatprep.subr.bf16.mxu0 0
        %326 = vmatpush1.bf16.msra.mxu0 0
        %327 = vmatprep.subr.bf16.mxu0 0
        %328 = vmatpush1.bf16.msra.mxu0 0
        %329 = vmatprep.subr.bf16.mxu0 0
        %330 = vmatpush1.bf16.msra.mxu0 0
        %331 = vmatprep.mubr.bf16.mxu0 0
        %332 = vmatmul.mubr.bf16.gmra.mrb[0].mxu0 %v297
        %v333 = vpop.f32.mrb[0].mxu0
        %v334 = vadd.f32 0.0, %v333
        %v335 = vpop.f32.mrb[0].mxu0
        %v336 = vadd.f32 0.0, %v335
        %v337 = vpop.f32.mrb[0].mxu0
        %v338 = vadd.f32 0.0, %v337
        %v339 = vpop.f32.mrb[0].mxu0
        %v340 = vadd.f32 0.0, %v339
        %341 = vdwg.mxu0
        %v342 = vpack.c.bf16 %v338, %v334
        %v343 = vpack.c.bf16 %v340, %v336
        %v346 = vunpack.c.l.b16 %v342
        %v347 = vunpack.c.l.b16 %v343
        %v348 = vunpack.c.h.b16 %v342
        %v349 = vunpack.c.h.b16 %v343
        %v350 = vpack.c.b16 %v347, %v346
        %v351 = vpack.c.b16 %v349, %v348
        %354 = vst [vmem:[%s256] sm:$0xff] %v350
        %355 = vst [vmem:[%s256 + $0x8] sm:$0xff] %v351
        %v356 = vld [vmem:[#allocation5 + $0x8] sm:$0xf]
        %v357 = vld [vmem:[#allocation5 + $0xc] sm:$0xf]
        %v360 = vunpack.c.l.b16 %v356
        %v361 = vunpack.c.l.b16 %v357
        %v362 = vpack.c.b16 %v361, %v360
        %v364 = vsel %vm295, %v362, 0
        %366 = vmatprep.subr.bf16.mxu0 %v292
        %367 = vmatpush1.bf16.msra.mxu0 %v291
        %368 = vmatprep.subr.bf16.mxu0 0
        %369 = vmatpush1.bf16.msra.mxu0 0
        %370 = vmatprep.subr.bf16.mxu0 0
        %371 = vmatpush1.bf16.msra.mxu0 0
        %372 = vmatprep.subr.bf16.mxu0 0
        %373 = vmatpush1.bf16.msra.mxu0 0
        %374 = vmatprep.subr.bf16.mxu0 0
        %375 = vmatpush1.bf16.msra.mxu0 0
        %376 = vmatprep.subr.bf16.mxu0 0
        %377 = vmatpush1.bf16.msra.mxu0 0
        %378 = vmatprep.subr.bf16.mxu0 0
        %379 = vmatpush1.bf16.msra.mxu0 0
        %380 = vmatprep.subr.bf16.mxu0 0
        %381 = vmatpush1.bf16.msra.mxu0 0
        %382 = vmatprep.subr.bf16.mxu0 0
        %383 = vmatpush1.bf16.msra.mxu0 0
        %384 = vmatprep.subr.bf16.mxu0 0
        %385 = vmatpush1.bf16.msra.mxu0 0
        %386 = vmatprep.subr.bf16.mxu0 0
        %387 = vmatpush1.bf16.msra.mxu0 0
        %388 = vmatprep.subr.bf16.mxu0 0
        %389 = vmatpush1.bf16.msra.mxu0 0
        %390 = vmatprep.subr.bf16.mxu0 0
        %391 = vmatpush1.bf16.msra.mxu0 0
        %392 = vmatprep.subr.bf16.mxu0 0
        %393 = vmatpush1.bf16.msra.mxu0 0
        %394 = vmatprep.subr.bf16.mxu0 0
        %395 = vmatpush1.bf16.msra.mxu0 0
        %396 = vmatprep.subr.bf16.mxu0 0
        %397 = vmatpush1.bf16.msra.mxu0 0
        %398 = vmatprep.mubr.bf16.mxu0 0
        %399 = vmatmul.mubr.bf16.gmra.mrb[0].mxu0 %v364
        %v400 = vpop.f32.mrb[0].mxu0
        %v401 = vadd.f32 0.0, %v400
        %v402 = vpop.f32.mrb[0].mxu0
        %v403 = vadd.f32 0.0, %v402
        %v404 = vpop.f32.mrb[0].mxu0
        %v405 = vadd.f32 0.0, %v404
        %v406 = vpop.f32.mrb[0].mxu0
        %v407 = vadd.f32 0.0, %v406
        %408 = vdwg.mxu0
        %v409 = vpack.c.bf16 %v405, %v401
        %v410 = vpack.c.bf16 %v407, %v403
        %v413 = vunpack.c.l.b16 %v409
        %v414 = vunpack.c.l.b16 %v410
        %v415 = vunpack.c.h.b16 %v409
        %v416 = vunpack.c.h.b16 %v410
        %v417 = vpack.c.b16 %v414, %v413
        %v418 = vpack.c.b16 %v416, %v415
        %421 = vst [vmem:[%s263] sm:$0xff] %v417
        %422 = vst [vmem:[%s263 + $0x8] sm:$0xff] %v418
        %v423 = vld [vmem:[#allocation5 + $0x10] sm:$0xf]
        %v424 = vld [vmem:[#allocation5 + $0x14] sm:$0xf]
        %v427 = vunpack.c.l.b16 %v423
        %v428 = vunpack.c.l.b16 %v424
        %v429 = vpack.c.b16 %v428, %v427
        %v431 = vsel %vm295, %v429, 0
        %433 = vmatprep.subr.bf16.mxu0 %v292
        %434 = vmatpush1.bf16.msra.mxu0 %v291
        %435 = vmatprep.subr.bf16.mxu0 0
        %436 = vmatpush1.bf16.msra.mxu0 0
        %437 = vmatprep.subr.bf16.mxu0 0
        %438 = vmatpush1.bf16.msra.mxu0 0
        %439 = vmatprep.subr.bf16.mxu0 0
        %440 = vmatpush1.bf16.msra.mxu0 0
        %441 = vmatprep.subr.bf16.mxu0 0
        %442 = vmatpush1.bf16.msra.mxu0 0
        %443 = vmatprep.subr.bf16.mxu0 0
        %444 = vmatpush1.bf16.msra.mxu0 0
        %445 = vmatprep.subr.bf16.mxu0 0
        %446 = vmatpush1.bf16.msra.mxu0 0
        %447 = vmatprep.subr.bf16.mxu0 0
        %448 = vmatpush1.bf16.msra.mxu0 0
        %449 = vmatprep.subr.bf16.mxu0 0
        %450 = vmatpush1.bf16.msra.mxu0 0
        %451 = vmatprep.subr.bf16.mxu0 0
        %452 = vmatpush1.bf16.msra.mxu0 0
        %453 = vmatprep.subr.bf16.mxu0 0
        %454 = vmatpush1.bf16.msra.mxu0 0
        %455 = vmatprep.subr.bf16.mxu0 0
        %456 = vmatpush1.bf16.msra.mxu0 0
        %457 = vmatprep.subr.bf16.mxu0 0
        %458 = vmatpush1.bf16.msra.mxu0 0
        %459 = vmatprep.subr.bf16.mxu0 0
        %460 = vmatpush1.bf16.msra.mxu0 0
        %461 = vmatprep.subr.bf16.mxu0 0
        %462 = vmatpush1.bf16.msra.mxu0 0
        %463 = vmatprep.subr.bf16.mxu0 0
        %464 = vmatpush1.bf16.msra.mxu0 0
        %465 = vmatprep.mubr.bf16.mxu0 0
        %466 = vmatmul.mubr.bf16.gmra.mrb[0].mxu0 %v431
        %v467 = vpop.f32.mrb[0].mxu0
        %v468 = vadd.f32 0.0, %v467
        %v469 = vpop.f32.mrb[0].mxu0
        %v470 = vadd.f32 0.0, %v469
        %v471 = vpop.f32.mrb[0].mxu0
        %v472 = vadd.f32 0.0, %v471
        %v473 = vpop.f32.mrb[0].mxu0
        %v474 = vadd.f32 0.0, %v473
        %475 = vdwg.mxu0
        %v476 = vpack.c.bf16 %v472, %v468
        %v477 = vpack.c.bf16 %v474, %v470
        %v480 = vunpack.c.l.b16 %v476
        %v481 = vunpack.c.l.b16 %v477
        %v482 = vunpack.c.h.b16 %v476
        %v483 = vunpack.c.h.b16 %v477
        %v484 = vpack.c.b16 %v481, %v480
        %v485 = vpack.c.b16 %v483, %v482
        %488 = vst [vmem:[%s270] sm:$0xff] %v484
        %489 = vst [vmem:[%s270 + $0x8] sm:$0xff] %v485
        %s490 = sand.u32 %s97, 1
        %s491 = scalar_lea.sflag [#allocation4], %s490
        %s492 = sand.u32 %s97, 1
        %s493 = smul.addr %s492, 16
        %s494 = scalar_lea.vmem [#allocation7], %s493
        %s495 = sand.u32 %s26, 1
        %s496 = scalar_lea.sflag [#allocation9], %s495
        %s497 = sand.u32 %s125, 1
        %s498 = smul.addr %s497, 16
        %s499 = scalar_lea.vmem [#allocation8], %s498
        %s500 = sand.u32 %s26, 1
        %s501 = scalar_lea.sflag [#allocation9], %s500
        %s502 = sand.u32 %s153, 1
        %s503 = smul.addr %s502, 16
        %s504 = scalar_lea.vmem [#allocation10], %s503
        // Predicated region
        $region37: #{tpu_custom_call.1} parent=27 // pred_check
          %p505 = pneg %p107
        $region38: #{tpu_custom_call.1} parent=27 // pred_check_branch
          %507 = sbr.rel (%p505) target = $region40
        $region39: #{tpu_custom_call.1} parent=27 // pred_region
          %s508 = smul.u32 2, %s31
          %s510 = ssub.s32 256, 256
          %511 = vsyncadd %s491, %s510
          %s512 = smul.addr %s30, 4
          %s513 = sadd.s32 %s508, %s512
          %s514 = smul.addr %s513, 64
          %s515 = scalar_lea.hbm %s2, %s514
          %s516 = sshll.u32 %s494, 4
          %s517 = int_to_ptr.vmem [resolvable:$true] %s516
          %522 = dma.vmem_to_hbm [thread:$0]  %s517, 256, %s515, %s491, 128, 128, 8
        $region40: #{tpu_custom_call.1} parent=27 // pred_fallthru
          _
        // Predicated region
        $region41: #{tpu_custom_call.1} parent=27 // pred_check
          %p523 = pneg %p135
        $region42: #{tpu_custom_call.1} parent=27 // pred_check_branch
          %525 = sbr.rel (%p523) target = $region44
        $region43: #{tpu_custom_call.1} parent=27 // pred_region
          %s526 = smul.u32 2, %s31
          %s528 = ssub.s32 256, 256
          %529 = vsyncadd %s496, %s528
          %s530 = smul.addr %s30, 4
          %s531 = sadd.s32 %s526, %s530
          %s532 = smul.addr %s531, 64
          %s533 = scalar_lea.hbm %s3, %s532
          %s534 = sshll.u32 %s499, 4
          %s535 = int_to_ptr.vmem [resolvable:$true] %s534
          %540 = dma.vmem_to_hbm [thread:$0]  %s535, 256, %s533, %s496, 128, 128, 8
        $region44: #{tpu_custom_call.1} parent=27 // pred_fallthru
          _
        // Predicated region
        $region45: #{tpu_custom_call.1} parent=27 // pred_check
          %p541 = pneg %p163
        $region46: #{tpu_custom_call.1} parent=27 // pred_check_branch
          %543 = sbr.rel (%p541) target = $region48
        $region47: #{tpu_custom_call.1} parent=27 // pred_region
          %s544 = smul.u32 2, %s31
          %s546 = ssub.s32 256, 256
          %547 = vsyncadd %s501, %s546
          %s548 = smul.addr %s30, 4
          %s549 = sadd.s32 %s544, %s548
          %s550 = smul.addr %s549, 64
          %s551 = scalar_lea.hbm %s4, %s550
          %s552 = sshll.u32 %s504, 4
          %s553 = int_to_ptr.vmem [resolvable:$true] %s552
          %558 = dma.vmem_to_hbm [thread:$0]  %s553, 256, %s551, %s501, 128, 128, 8
        $region48: #{tpu_custom_call.1} parent=27 // pred_fallthru
          _
      $region28: #{tpu_custom_call.1} parent=5 // pred_fallthru
        _
      %p559 = scmp.le.s32.totalorder 2, %s21
      // Predicated region
      $region49: #{tpu_custom_call.1} parent=5 // pred_check
        %p560 = pneg %p559
      $region50: #{tpu_custom_call.1} parent=5 // pred_check_branch
        %562 = sbr.rel (%p560) target = $region52
      $region51: #{tpu_custom_call.1} parent=5 // pred_region
        %s563 = ssub.s32 %s21, 2
        // Predicated region
        $region53: #{tpu_custom_call.1} parent=51 // pred_check
          %p564 = pneg %p113
        $region54: #{tpu_custom_call.1} parent=51 // pred_check_branch
          %566 = sbr.rel (%p564) target = $region56
        $region55: #{tpu_custom_call.1} parent=51 // pred_region
          %s567 = sand.u32 %s98, 1
          %s568 = scalar_lea.sflag [#allocation4], %s567
          %s569 = sand.u32 %s98, 1
          %s570 = smul.addr %s569, 16
          %s571 = scalar_lea.vmem [#allocation7], %s570
          %572 = dma.done %s568, 256
        $region56: #{tpu_custom_call.1} parent=51 // pred_fallthru
          _
        // Predicated region
        $region57: #{tpu_custom_call.1} parent=51 // pred_check
          %p573 = pneg %p141
        $region58: #{tpu_custom_call.1} parent=51 // pred_check_branch
          %575 = sbr.rel (%p573) target = $region60
        $region59: #{tpu_custom_call.1} parent=51 // pred_region
          %s576 = sand.u32 %s27, 1
          %s577 = scalar_lea.sflag [#allocation9], %s576
          %s578 = sand.u32 %s126, 1
          %s579 = smul.addr %s578, 16
          %s580 = scalar_lea.vmem [#allocation8], %s579
          %581 = dma.done %s577, 256
        $region60: #{tpu_custom_call.1} parent=51 // pred_fallthru
          _
        // Predicated region
        $region61: #{tpu_custom_call.1} parent=51 // pred_check
          %p582 = pneg %p169
        $region62: #{tpu_custom_call.1} parent=51 // pred_check_branch
          %584 = sbr.rel (%p582) target = $region64
        $region63: #{tpu_custom_call.1} parent=51 // pred_region
          %s585 = sand.u32 %s27, 1
          %s586 = scalar_lea.sflag [#allocation9], %s585
          %s587 = sand.u32 %s154, 1
          %s588 = smul.addr %s587, 16
          %s589 = scalar_lea.vmem [#allocation10], %s588
          %590 = dma.done %s586, 256
        $region64: #{tpu_custom_call.1} parent=51 // pred_fallthru
          _
      $region52: #{tpu_custom_call.1} parent=5 // pred_fallthru
        _
    $region6: #{tpu_custom_call.1} parent=1 // loop_footer
      %s25 = sadd.s32 1, %s21
    $region7: #{tpu_custom_call.1} parent=1 // loop_footer_branch
      %20 = sbr.rel target = $region3
    $region8: #{tpu_custom_call.1} parent=1 // loop_exit
      _
    %591 = vsyncpa [#allocation3], 1
    %s592 = scalar_lea.sflag [#allocation3], 1
    %593 = vsyncpa %s592, 1
    %594 = vsyncpa [#allocation6], 1
    %595 = vsyncpa [#allocation4], 1
    %s596 = scalar_lea.sflag [#allocation4], 1
    %597 = vsyncpa %s596, 1
    %598 = vsyncpa [#allocation9], 1
    %s599 = scalar_lea.sflag [#allocation9], 1
    %600 = vsyncpa %s599, 1

// kernel: tpu_custom_call.1
$region0: #{tpu_custom_call.1}
  #allocation0 [shape = 'u32[]', space=smem, size = 0x4, offset = 0x4, fixed_abs, tag = 'smem constant byte address 0x4 - core index']
  #allocation1 [shape = 'u32[144,128]{1,0:T(1,128)}', space=vmem, size = 0x12000, scoped, tag = 'internal scratch']
  %s0 = inlined_call_operand.hbm [shape: bf16[2,16,256], index: 0, kind: input, shape index: {}]
  %s1 = inlined_call_operand.hbm [shape: bf16[48,16], index: 1, kind: input, shape index: {}]
  %s2 = inlined_call_operand.hbm [shape: bf16[2,16,256], index: 2, kind: output, shape index: {0}]
  %s3 = inlined_call_operand.hbm [shape: bf16[2,16,256], index: 3, kind: output, shape index: {1}]
  %s4 = inlined_call_operand.hbm [shape: bf16[2,16,256], index: 4, kind: output, shape index: {2}]
  %5 = xla_tuple %s2, %s3, %s4
  %s6 = sld [smem:[#allocation0]]
  $region65: #{tpu_custom_call.1} parent=0
    _
  %s8 = ssub.s32 1, %s6
  %s9 = scalar_select 0, %s8, %s6
  $region1: #{tpu_custom_call.1} parent=0
    #allocation2 [shape = 'u8[16384]{0}', space=vmem, size = 0x4000, scoped, tag = 'input window, operand 0']
    #allocation3 [shape = 's32[2]{0}', space=sflag, size = 0x8, scoped, tag = 'scoped memory for tpu_custom_call.1']
    #allocation4 [shape = 's32[2]{0}', space=sflag, size = 0x8, scoped, tag = 'scoped memory for tpu_custom_call.1']
    #allocation5 [shape = 'u8[12288]{0}', space=vmem, size = 0x3000, scoped, tag = 'input window, operand 1, single buffered']
    #allocation6 [shape = 's32[1]{0}', space=sflag, size = 0x4, scoped, tag = 'scoped memory for tpu_custom_call.1']
    #allocation7 [shape = 'u8[16384]{0}', space=vmem, size = 0x4000, scoped, tag = 'output window, operand 0']
    #allocation8 [shape = 'u8[16384]{0}', space=vmem, size = 0x4000, scoped, tag = 'output window, operand 1']
    #allocation9 [shape = 's32[2]{0}', space=sflag, size = 0x8, scoped, tag = 'scoped memory for tpu_custom_call.1']
    #allocation10 [shape = 'u8[16384]{0}', space=vmem, size = 0x4000, scoped, tag = 'output window, operand 2']
    %10 = vsyncpa [#allocation3], 0
    %s11 = scalar_lea.sflag [#allocation3], 1
    %12 = vsyncpa %s11, 0
    %13 = vsyncpa [#allocation6], 0
    %14 = vsyncpa [#allocation4], 0
    %s15 = scalar_lea.sflag [#allocation4], 1
    %16 = vsyncpa %s15, 0
    %17 = vsyncpa [#allocation9], 0
    %s18 = scalar_lea.sflag [#allocation9], 1
    %19 = vsyncpa %s18, 0
    loop: start=0, step=1, limit=4
    $region2: #{tpu_custom_call.1} parent=1 // loop_pre_header
      _
    $region3: #{tpu_custom_call.1} parent=1 // loop_header
      %s21 = sphi 0, %s25
      %p22 = scmp.ge.s32.totalorder %s21, 4
      %s28 = sphi 0, %s40
      %s29 = sphi 0, %s36
      %s30 = sphi 0, %s28
      %s31 = sphi 0, %s29
      %s32 = sphi 0, %s30
      %s33 = sphi 0, %s31
      %s45 = sphi 0, %s47
      %s48 = sphi 0, %s45
      %s49 = sphi 0, %s48
      %s65 = sphi 0, %s49
      %s69 = sphi 0, %s69
      %s71 = sphi 0, %s69
      %s72 = sphi 0, %s71
      %s86 = sphi 0, %s72
      %s94 = sphi 0, %s96
      %s97 = sphi 0, %s94
      %s98 = sphi 0, %s97
      %s114 = sphi 0, %s98
      %s122 = sphi 0, %s124
      %s125 = sphi 0, %s122
      %s126 = sphi 0, %s125
      %s142 = sphi 0, %s126
      %s150 = sphi 0, %s152
      %s153 = sphi 0, %s150
      %s154 = sphi 0, %s153
      %s170 = sphi 0, %s154
    $region4: #{tpu_custom_call.1} parent=1 // loop_header_branch
      %24 = sbr.rel (%p22) target = $region8
    $region5: #{tpu_custom_call.1} parent=1 // loop_body
      %s26 = ssub.s32 %s21, 1
      %s27 = ssub.s32 %s21, 2
      %s34 = sadd.s32 1, %s29
      %p35 = scmp.ge.s32.totalorder %s34, 1
      %s36 = scalar_select %p35, 0, %s34
      %s37 = sadd.s32 1, %s28
      %s38 = scalar_select %p35, %s37, %s28
      %p39 = scmp.ge.s32.totalorder %s38, 2
      %s40 = scalar_select %p39, 0, %s38
      %s41 = ssub.s32 %s28, %s40
      %s42 = ssub.s32 %s29, %s36
      %s43 = sor.u32 %s41, %s42
      %p44 = scmp.eq.s32.totalorder %s43, 0
      %s46 = sadd.s32 %s45, 1
      %s47 = scalar_select %p44, %s45, %s46
      %p50 = pneg %p44
      %p51 = scmp.eq.s32.totalorder %s21, 1
      %p52 = por %p50, %p51
      %p53 = scmp.ne.s32.totalorder %s45, %s48
      %p54 = scmp.eq.s32.totalorder %s21, 0
      %p55 = por %p53, %p54
      %p56 = scmp.ne.s32.totalorder %s45, %s48
      %p57 = scmp.eq.s32.totalorder %s26, 1
      %p58 = por %p56, %p57
      %p59 = scmp.ne.s32.totalorder %s48, %s49
      %p60 = scmp.eq.s32.totalorder %s26, 0
      %p61 = por %p59, %p60
      %p62 = scmp.ne.s32.totalorder %s48, %s49
      %p63 = scmp.eq.s32.totalorder %s27, 1
      %p64 = por %p62, %p63
      %p66 = scmp.ne.s32.totalorder %s49, %s65
      %p67 = scmp.eq.s32.totalorder %s27, 0
      %p68 = por %p66, %p67
      %s70 = sadd.s32 %s69, 1
      %p73 = scmp.eq.s32.totalorder %s21, 1
      %p74 = scmp.ne.s32.totalorder %s69, %s71
      %p75 = scmp.eq.s32.totalorder %s21, 0
      %p76 = por %p74, %p75
      %p77 = scmp.ne.s32.totalorder %s69, %s71
      %p78 = scmp.eq.s32.totalorder %s26, 1
      %p79 = por %p77, %p78
      %p80 = scmp.ne.s32.totalorder %s71, %s72
      %p81 = scmp.eq.s32.totalorder %s26, 0
      %p82 = por %p80, %p81
      %p83 = scmp.ne.s32.totalorder %s71, %s72
      %p84 = scmp.eq.s32.totalorder %s27, 1
      %p85 = por %p83, %p84
      %p87 = scmp.ne.s32.totalorder %s72, %s86
      %p88 = scmp.eq.s32.totalorder %s27, 0
      %p89 = por %p87, %p88
      %s90 = ssub.s32 %s28, %s40
      %s91 = ssub.s32 %s29, %s36
      %s92 = sor.u32 %s90, %s91
      %p93 = scmp.eq.s32.totalorder %s92, 0
      %s95 = sadd.s32 %s94, 1
      %s96 = scalar_select %p93, %s94, %s95
      %p99 = pneg %p93
      %p100 = scmp.eq.s32.totalorder %s21, 1
      %p101 = por %p99, %p100
      %p102 = scmp.ne.s32.totalorder %s94, %s97
      %p103 = scmp.eq.s32.totalorder %s21, 0
      %p104 = por %p102, %p103
      %p105 = scmp.ne.s32.totalorder %s94, %s97
      %p106 = scmp.eq.s32.totalorder %s26, 1
      %p107 = por %p105, %p106
      %p108 = scmp.ne.s32.totalorder %s97, %s98
      %p109 = scmp.eq.s32.totalorder %s26, 0
      %p110 = por %p108, %p109
      %p111 = scmp.ne.s32.totalorder %s97, %s98
      %p112 = scmp.eq.s32.totalorder %s27, 1
      %p113 = por %p111, %p112
      %p115 = scmp.ne.s32.totalorder %s98, %s114
      %p116 = scmp.eq.s32.totalorder %s27, 0
      %p117 = por %p115, %p116
      %s118 = ssub.s32 %s28, %s40
      %s119 = ssub.s32 %s29, %s36
      %s120 = sor.u32 %s118, %s119
      %p121 = scmp.eq.s32.totalorder %s120, 0
      %s123 = sadd.s32 %s122, 1
      %s124 = scalar_select %p121, %s122, %s123
      %p127 = pneg %p121
      %p128 = scmp.eq.s32.totalorder %s21, 1
      %p129 = por %p127, %p128
      %p130 = scmp.ne.s32.totalorder %s122, %s125
      %p131 = scmp.eq.s32.totalorder %s21, 0
      %p132 = por %p130, %p131
      %p133 = scmp.ne.s32.totalorder %s122, %s125
      %p134 = scmp.eq.s32.totalorder %s26, 1
      %p135 = por %p133, %p134
      %p136 = scmp.ne.s32.totalorder %s125, %s126
      %p137 = scmp.eq.s32.totalorder %s26, 0
      %p138 = por %p136, %p137
      %p139 = scmp.ne.s32.totalorder %s125, %s126
      %p140 = scmp.eq.s32.totalorder %s27, 1
      %p141 = por %p139, %p140
      %p143 = scmp.ne.s32.totalorder %s126, %s142
      %p144 = scmp.eq.s32.totalorder %s27, 0
      %p145 = por %p143, %p144
      %s146 = ssub.s32 %s28, %s40
      %s147 = ssub.s32 %s29, %s36
      %s148 = sor.u32 %s146, %s147
      %p149 = scmp.eq.s32.totalorder %s148, 0
      %s151 = sadd.s32 %s150, 1
      %s152 = scalar_select %p149, %s150, %s151
      %p155 = pneg %p149
      %p156 = scmp.eq.s32.totalorder %s21, 1
      %p157 = por %p155, %p156
      %p158 = scmp.ne.s32.totalorder %s150, %s153
      %p159 = scmp.eq.s32.totalorder %s21, 0
      %p160 = por %p158, %p159
      %p161 = scmp.ne.s32.totalorder %s150, %s153
      %p162 = scmp.eq.s32.totalorder %s26, 1
      %p163 = por %p161, %p162
      %p164 = scmp.ne.s32.totalorder %s153, %s154
      %p165 = scmp.eq.s32.totalorder %s26, 0
      %p166 = por %p164, %p165
      %p167 = scmp.ne.s32.totalorder %s153, %s154
      %p168 = scmp.eq.s32.totalorder %s27, 1
      %p169 = por %p167, %p168
      %p171 = scmp.ne.s32.totalorder %s154, %s170
      %p172 = scmp.eq.s32.totalorder %s27, 0
      %p173 = por %p171, %p172
      %p174 = scmp.le.s32.totalorder 1, %s21
      %p175 = scmp.lt.s32.totalorder %s21, 3
      %p176 = pnand %p174, %p175
      %p177 = pneg %p176
      // Predicated region
      $region9: #{tpu_custom_call.1} parent=5 // pred_check
        _
      $region10: #{tpu_custom_call.1} parent=5 // pred_check_branch
        %179 = sbr.rel (%p176) target = $region12
      $region11: #{tpu_custom_call.1} parent=5 // pred_region
        %s180 = ssub.s32 %s21, 1
        // Predicated region
        $region13: #{tpu_custom_call.1} parent=11 // pred_check
          %p181 = pneg %p82
        $region14: #{tpu_custom_call.1} parent=11 // pred_check_branch
          %183 = sbr.rel (%p181) target = $region16
        $region15: #{tpu_custom_call.1} parent=11 // pred_region
          %s185 = ssub.s32 384, 384
          %186 = vsyncadd [#allocation6], %s185
          %s187 = sshll.u32 [#allocation5], 4
          %s188 = int_to_ptr.vmem [resolvable:$true] %s187
          %193 = dma.hbm_to_vmem [thread:$0]  %s1, 384, %s188, [#allocation6], 64, 64, 4
        $region16: #{tpu_custom_call.1} parent=11 // pred_fallthru
          _
      $region12: #{tpu_custom_call.1} parent=5 // pred_fallthru
        _
      %p194 = scmp.lt.s32.totalorder %s21, 2
      // Predicated region
      $region17: #{tpu_custom_call.1} parent=5 // pred_check
        %p195 = pneg %p194
      $region18: #{tpu_custom_call.1} parent=5 // pred_check_branch
        %197 = sbr.rel (%p195) target = $region20
      $region19: #{tpu_custom_call.1} parent=5 // pred_region
        // Predicated region
        $region21: #{tpu_custom_call.1} parent=19 // pred_check
          %p198 = pneg %p55
        $region22: #{tpu_custom_call.1} parent=19 // pred_check_branch
          %200 = sbr.rel (%p198) target = $region24
        $region23: #{tpu_custom_call.1} parent=19 // pred_region
          %s201 = sand.u32 %s45, 1
          %s202 = scalar_lea.sflag [#allocation3], %s201
          %s203 = sand.u32 %s45, 1
          %s204 = smul.addr %s203, 16
          %s205 = scalar_lea.vmem [#allocation2], %s204
          %s206 = smul.u32 2, %s29
          %s208 = ssub.s32 256, 256
          %209 = vsyncadd %s202, %s208
          %s210 = smul.addr %s28, 4
          %s211 = sadd.s32 %s206, %s210
          %s212 = smul.addr %s211, 64
          %s213 = scalar_lea.hbm %s0, %s212
          %s214 = sshll.u32 %s205, 4
          %s215 = int_to_ptr.vmem [resolvable:$true] %s214
          %220 = dma.hbm_to_vmem [thread:$0]  %s213, 256, %s215, %s202, 128, 128, 8
        $region24: #{tpu_custom_call.1} parent=19 // pred_fallthru
          _
      $region20: #{tpu_custom_call.1} parent=5 // pred_fallthru
        _
      %p221 = scmp.le.s32.totalorder 1, %s21
      %p222 = scmp.lt.s32.totalorder %s21, 3
      %p223 = pnand %p221, %p222
      %p224 = pneg %p223
      // Predicated region
      $region25: #{tpu_custom_call.1} parent=5 // pred_check
        _
      $region26: #{tpu_custom_call.1} parent=5 // pred_check_branch
        %226 = sbr.rel (%p223) target = $region28
      $region27: #{tpu_custom_call.1} parent=5 // pred_region
        %s227 = ssub.s32 %s21, 1
        %s228 = sand.u32 %s48, 1
        %s229 = scalar_lea.sflag [#allocation3], %s228
        %s230 = sand.u32 %s48, 1
        %s231 = smul.addr %s230, 16
        %s232 = scalar_lea.vmem [#allocation2], %s231
        // Predicated region
        $region29: #{tpu_custom_call.1} parent=27 // pred_check
          %p233 = pneg %p61
        $region30: #{tpu_custom_call.1} parent=27 // pred_check_branch
          %235 = sbr.rel (%p233) target = $region32
        $region31: #{tpu_custom_call.1} parent=27 // pred_region
          %236 = dma.done %s229, 256
        $region32: #{tpu_custom_call.1} parent=27 // pred_fallthru
          _
        // Predicated region
        $region33: #{tpu_custom_call.1} parent=27 // pred_check
          %p237 = pneg %p82
        $region34: #{tpu_custom_call.1} parent=27 // pred_check_branch
          %239 = sbr.rel (%p237) target = $region36
        $region35: #{tpu_custom_call.1} parent=27 // pred_region
          %240 = dma.done [#allocation6], 384
        $region36: #{tpu_custom_call.1} parent=27 // pred_fallthru
          _
        %s241 = sand.u32 %s48, 1
        %s242 = scalar_lea.sflag [#allocation3], %s241
        %s243 = sand.u32 %s48, 1
        %s244 = smul.addr %s243, 16
        %s245 = scalar_lea.vmem [#allocation2], %s244
        %p246 = pneg %p61
        %p247 = pneg %p58
        %p248 = pneg %p82
        %p249 = pneg %p79
        %p250 = pneg %p110
        %p251 = pneg %p107
        %s252 = sand.u32 %s97, 1
        %s253 = scalar_lea.sflag [#allocation4], %s252
        %s254 = sand.u32 %s97, 1
        %s255 = smul.addr %s254, 16
        %s256 = scalar_lea.vmem [#allocation7], %s255
        %p257 = pneg %p138
        %p258 = pneg %p135
        %s259 = sand.u32 %s26, 1
        %s260 = scalar_lea.sflag [#allocation9], %s259
        %s261 = sand.u32 %s125, 1
        %s262 = smul.addr %s261, 16
        %s263 = scalar_lea.vmem [#allocation8], %s262
        %p264 = pneg %p166
        %p265 = pneg %p163
        %s266 = sand.u32 %s26, 1
        %s267 = scalar_lea.sflag [#allocation9], %s266
        %s268 = sand.u32 %s153, 1
        %s269 = smul.addr %s268, 16
        %s270 = scalar_lea.vmem [#allocation10], %s269
        %s271 = smul.u32 2, %s31
        %s272 = smul.u32 2, %s31
        %s273 = smul.u32 2, %s31
        %s274 = smul.u32 2, %s31
        %v276 = vld [vmem:[%s232] sm:$0xff]
        %v277 = vld [vmem:[%s232 + $0x8] sm:$0xff]
        %v278 = vld [vmem:[#allocation5] sm:$0xf]
        %v279 = vld [vmem:[#allocation5 + $0x4] sm:$0xf]
        %v282 = vunpack.c.l.b16 %v278
        %v283 = vunpack.c.l.b16 %v279
        %v284 = vpack.c.b16 %v283, %v282
        %v287 = vunpack.c.l.b16 %v276
        %v288 = vunpack.c.h.b16 %v276
        %v289 = vunpack.c.l.b16 %v277
        %v290 = vunpack.c.h.b16 %v277
        %v291 = vpack.c.b16 %v289, %v287
        %v292 = vpack.c.b16 %v290, %v288
        %vm295 = vcmask 130048
        %v297 = vsel %vm295, %v284, 0
        %299 = vmatprep.subr.bf16.mxu0 %v292
        %300 = vmatpush1.bf16.msra.mxu0 %v291
        %301 = vmatprep.subr.bf16.mxu0 0
        %302 = vmatpush1.bf16.msra.mxu0 0
        %303 = vmatprep.subr.bf16.mxu0 0
        %304 = vmatpush1.bf16.msra.mxu0 0
        %305 = vmatprep.subr.bf16.mxu0 0
        %306 = vmatpush1.bf16.msra.mxu0 0
        %307 = vmatprep.subr.bf16.mxu0 0
        %308 = vmatpush1.bf16.msra.mxu0 0
        %309 = vmatprep.subr.bf16.mxu0 0
        %310 = vmatpush1.bf16.msra.mxu0 0
        %311 = vmatprep.subr.bf16.mxu0 0
        %312 = vmatpush1.bf16.msra.mxu0 0
        %313 = vmatprep.subr.bf16.mxu0 0
        %314 = vmatpush1.bf16.msra.mxu0 0
        %315 = vmatprep.subr.bf16.mxu0 0
        %316 = vmatpush1.bf16.msra.mxu0 0
        %317 = vmatprep.subr.bf16.mxu0 0
        %318 = vmatpush1.bf16.msra.mxu0 0
        %319 = vmatprep.subr.bf16.mxu0 0
        %320 = vmatpush1.bf16.msra.mxu0 0
        %321 = vmatprep.subr.bf16.mxu0 0
        %322 = vmatpush1.bf16.msra.mxu0 0
        %323 = vmatprep.subr.bf16.mxu0 0
        %324 = vmatpush1.bf16.msra.mxu0 0
        %325 = vmatprep.subr.bf16.mxu0 0
        %326 = vmatpush1.bf16.msra.mxu0 0
        %327 = vmatprep.subr.bf16.mxu0 0
        %328 = vmatpush1.bf16.msra.mxu0 0
        %329 = vmatprep.subr.bf16.mxu0 0
        %330 = vmatpush1.bf16.msra.mxu0 0
        %331 = vmatprep.mubr.bf16.mxu0 0
        %332 = vmatmul.mubr.bf16.gmra.mrb[0].mxu0 %v297
        %v333 = vpop.f32.mrb[0].mxu0
        %v334 = vadd.f32 0.0, %v333
        %v335 = vpop.f32.mrb[0].mxu0
        %v336 = vadd.f32 0.0, %v335
        %v337 = vpop.f32.mrb[0].mxu0
        %v338 = vadd.f32 0.0, %v337
        %v339 = vpop.f32.mrb[0].mxu0
        %v340 = vadd.f32 0.0, %v339
        %341 = vdwg.mxu0
        %v342 = vpack.c.bf16 %v338, %v334
        %v343 = vpack.c.bf16 %v340, %v336
        %v346 = vunpack.c.l.b16 %v342
        %v347 = vunpack.c.l.b16 %v343
        %v348 = vunpack.c.h.b16 %v342
        %v349 = vunpack.c.h.b16 %v343
        %v350 = vpack.c.b16 %v347, %v346
        %v351 = vpack.c.b16 %v349, %v348
        %354 = vst [vmem:[%s256] sm:$0xff] %v350
        %355 = vst [vmem:[%s256 + $0x8] sm:$0xff] %v351
        %v356 = vld [vmem:[#allocation5 + $0x8] sm:$0xf]
        %v357 = vld [vmem:[#allocation5 + $0xc] sm:$0xf]
        %v360 = vunpack.c.l.b16 %v356
        %v361 = vunpack.c.l.b16 %v357
        %v362 = vpack.c.b16 %v361, %v360
        %v364 = vsel %vm295, %v362, 0
        %366 = vmatprep.subr.bf16.mxu0 %v292
        %367 = vmatpush1.bf16.msra.mxu0 %v291
        %368 = vmatprep.subr.bf16.mxu0 0
        %369 = vmatpush1.bf16.msra.mxu0 0
        %370 = vmatprep.subr.bf16.mxu0 0
        %371 = vmatpush1.bf16.msra.mxu0 0
        %372 = vmatprep.subr.bf16.mxu0 0
        %373 = vmatpush1.bf16.msra.mxu0 0
        %374 = vmatprep.subr.bf16.mxu0 0
        %375 = vmatpush1.bf16.msra.mxu0 0
        %376 = vmatprep.subr.bf16.mxu0 0
        %377 = vmatpush1.bf16.msra.mxu0 0
        %378 = vmatprep.subr.bf16.mxu0 0
        %379 = vmatpush1.bf16.msra.mxu0 0
        %380 = vmatprep.subr.bf16.mxu0 0
        %381 = vmatpush1.bf16.msra.mxu0 0
        %382 = vmatprep.subr.bf16.mxu0 0
        %383 = vmatpush1.bf16.msra.mxu0 0
        %384 = vmatprep.subr.bf16.mxu0 0
        %385 = vmatpush1.bf16.msra.mxu0 0
        %386 = vmatprep.subr.bf16.mxu0 0
        %387 = vmatpush1.bf16.msra.mxu0 0
        %388 = vmatprep.subr.bf16.mxu0 0
        %389 = vmatpush1.bf16.msra.mxu0 0
        %390 = vmatprep.subr.bf16.mxu0 0
        %391 = vmatpush1.bf16.msra.mxu0 0
        %392 = vmatprep.subr.bf16.mxu0 0
        %393 = vmatpush1.bf16.msra.mxu0 0
        %394 = vmatprep.subr.bf16.mxu0 0
        %395 = vmatpush1.bf16.msra.mxu0 0
        %396 = vmatprep.subr.bf16.mxu0 0
        %397 = vmatpush1.bf16.msra.mxu0 0
        %398 = vmatprep.mubr.bf16.mxu0 0
        %399 = vmatmul.mubr.bf16.gmra.mrb[0].mxu0 %v364
        %v400 = vpop.f32.mrb[0].mxu0
        %v401 = vadd.f32 0.0, %v400
        %v402 = vpop.f32.mrb[0].mxu0
        %v403 = vadd.f32 0.0, %v402
        %v404 = vpop.f32.mrb[0].mxu0
        %v405 = vadd.f32 0.0, %v404
        %v406 = vpop.f32.mrb[0].mxu0
        %v407 = vadd.f32 0.0, %v406
        %408 = vdwg.mxu0
        %v409 = vpack.c.bf16 %v405, %v401
        %v410 = vpack.c.bf16 %v407, %v403
        %v413 = vunpack.c.l.b16 %v409
        %v414 = vunpack.c.l.b16 %v410
        %v415 = vunpack.c.h.b16 %v409
        %v416 = vunpack.c.h.b16 %v410
        %v417 = vpack.c.b16 %v414, %v413
        %v418 = vpack.c.b16 %v416, %v415
        %421 = vst [vmem:[%s263] sm:$0xff] %v417
        %422 = vst [vmem:[%s263 + $0x8] sm:$0xff] %v418
        %v423 = vld [vmem:[#allocation5 + $0x10] sm:$0xf]
        %v424 = vld [vmem:[#allocation5 + $0x14] sm:$0xf]
        %v427 = vunpack.c.l.b16 %v423
        %v428 = vunpack.c.l.b16 %v424
        %v429 = vpack.c.b16 %v428, %v427
        %v431 = vsel %vm295, %v429, 0
        %433 = vmatprep.subr.bf16.mxu0 %v292
        %434 = vmatpush1.bf16.msra.mxu0 %v291
        %435 = vmatprep.subr.bf16.mxu0 0
        %436 = vmatpush1.bf16.msra.mxu0 0
        %437 = vmatprep.subr.bf16.mxu0 0
        %438 = vmatpush1.bf16.msra.mxu0 0
        %439 = vmatprep.subr.bf16.mxu0 0
        %440 = vmatpush1.bf16.msra.mxu0 0
        %441 = vmatprep.subr.bf16.mxu0 0
        %442 = vmatpush1.bf16.msra.mxu0 0
        %443 = vmatprep.subr.bf16.mxu0 0
        %444 = vmatpush1.bf16.msra.mxu0 0
        %445 = vmatprep.subr.bf16.mxu0 0
        %446 = vmatpush1.bf16.msra.mxu0 0
        %447 = vmatprep.subr.bf16.mxu0 0
        %448 = vmatpush1.bf16.msra.mxu0 0
        %449 = vmatprep.subr.bf16.mxu0 0
        %450 = vmatpush1.bf16.msra.mxu0 0
        %451 = vmatprep.subr.bf16.mxu0 0
        %452 = vmatpush1.bf16.msra.mxu0 0
        %453 = vmatprep.subr.bf16.mxu0 0
        %454 = vmatpush1.bf16.msra.mxu0 0
        %455 = vmatprep.subr.bf16.mxu0 0
        %456 = vmatpush1.bf16.msra.mxu0 0
        %457 = vmatprep.subr.bf16.mxu0 0
        %458 = vmatpush1.bf16.msra.mxu0 0
        %459 = vmatprep.subr.bf16.mxu0 0
        %460 = vmatpush1.bf16.msra.mxu0 0
        %461 = vmatprep.subr.bf16.mxu0 0
        %462 = vmatpush1.bf16.msra.mxu0 0
        %463 = vmatprep.subr.bf16.mxu0 0
        %464 = vmatpush1.bf16.msra.mxu0 0
        %465 = vmatprep.mubr.bf16.mxu0 0
        %466 = vmatmul.mubr.bf16.gmra.mrb[0].mxu0 %v431
        %v467 = vpop.f32.mrb[0].mxu0
        %v468 = vadd.f32 0.0, %v467
        %v469 = vpop.f32.mrb[0].mxu0
        %v470 = vadd.f32 0.0, %v469
        %v471 = vpop.f32.mrb[0].mxu0
        %v472 = vadd.f32 0.0, %v471
        %v473 = vpop.f32.mrb[0].mxu0
        %v474 = vadd.f32 0.0, %v473
        %475 = vdwg.mxu0
        %v476 = vpack.c.bf16 %v472, %v468
        %v477 = vpack.c.bf16 %v474, %v470
        %v480 = vunpack.c.l.b16 %v476
        %v481 = vunpack.c.l.b16 %v477
        %v482 = vunpack.c.h.b16 %v476
        %v483 = vunpack.c.h.b16 %v477
        %v484 = vpack.c.b16 %v481, %v480
        %v485 = vpack.c.b16 %v483, %v482
        %488 = vst [vmem:[%s270] sm:$0xff] %v484
        %489 = vst [vmem:[%s270 + $0x8] sm:$0xff] %v485
        %s490 = sand.u32 %s97, 1
        %s491 = scalar_lea.sflag [#allocation4], %s490
        %s492 = sand.u32 %s97, 1
        %s493 = smul.addr %s492, 16
        %s494 = scalar_lea.vmem [#allocation7], %s493
        %s495 = sand.u32 %s26, 1
        %s496 = scalar_lea.sflag [#allocation9], %s495
        %s497 = sand.u32 %s125, 1
        %s498 = smul.addr %s497, 16
        %s499 = scalar_lea.vmem [#allocation8], %s498
        %s500 = sand.u32 %s26, 1
        %s501 = scalar_lea.sflag [#allocation9], %s500
        %s502 = sand.u32 %s153, 1
        %s503 = smul.addr %s502, 16
        %s504 = scalar_lea.vmem [#allocation10], %s503
        // Predicated region
        $region37: #{tpu_custom_call.1} parent=27 // pred_check
          %p505 = pneg %p107
        $region38: #{tpu_custom_call.1} parent=27 // pred_check_branch
          %507 = sbr.rel (%p505) target = $region40
        $region39: #{tpu_custom_call.1} parent=27 // pred_region
          %s508 = smul.u32 2, %s31
          %s510 = ssub.s32 256, 256
          %511 = vsyncadd %s491, %s510
          %s512 = smul.addr %s30, 4
          %s513 = sadd.s32 %s508, %s512
          %s514 = smul.addr %s513, 64
          %s515 = scalar_lea.hbm %s2, %s514
          %s516 = sshll.u32 %s494, 4
          %s517 = int_to_ptr.vmem [resolvable:$true] %s516
          %522 = dma.vmem_to_hbm [thread:$0]  %s517, 256, %s515, %s491, 128, 128, 8
        $region40: #{tpu_custom_call.1} parent=27 // pred_fallthru
          _
        // Predicated region
        $region41: #{tpu_custom_call.1} parent=27 // pred_check
          %p523 = pneg %p135
        $region42: #{tpu_custom_call.1} parent=27 // pred_check_branch
          %525 = sbr.rel (%p523) target = $region44
        $region43: #{tpu_custom_call.1} parent=27 // pred_region
          %s526 = smul.u32 2, %s31
          %s528 = ssub.s32 256, 256
          %529 = vsyncadd %s496, %s528
          %s530 = smul.addr %s30, 4
          %s531 = sadd.s32 %s526, %s530
          %s532 = smul.addr %s531, 64
          %s533 = scalar_lea.hbm %s3, %s532
          %s534 = sshll.u32 %s499, 4
          %s535 = int_to_ptr.vmem [resolvable:$true] %s534
          %540 = dma.vmem_to_hbm [thread:$0]  %s535, 256, %s533, %s496, 128, 128, 8
        $region44: #{tpu_custom_call.1} parent=27 // pred_fallthru
          _
        // Predicated region
        $region45: #{tpu_custom_call.1} parent=27 // pred_check
          %p541 = pneg %p163
        $region46: #{tpu_custom_call.1} parent=27 // pred_check_branch
          %543 = sbr.rel (%p541) target = $region48
        $region47: #{tpu_custom_call.1} parent=27 // pred_region
          %s544 = smul.u32 2, %s31
          %s546 = ssub.s32 256, 256
          %547 = vsyncadd %s501, %s546
          %s548 = smul.addr %s30, 4
          %s549 = sadd.s32 %s544, %s548
          %s550 = smul.addr %s549, 64
          %s551 = scalar_lea.hbm %s4, %s550
          %s552 = sshll.u32 %s504, 4
          %s553 = int_to_ptr.vmem [resolvable:$true] %s552
          %558 = dma.vmem_to_hbm [thread:$0]  %s553, 256, %s551, %s501, 128, 128, 8
        $region48: #{tpu_custom_call.1} parent=27 // pred_fallthru
          _
      $region28: #{tpu_custom_call.1} parent=5 // pred_fallthru
        _
      %p559 = scmp.le.s32.totalorder 2, %s21
      // Predicated region
      $region49: #{tpu_custom_call.1} parent=5 // pred_check
        %p560 = pneg %p559
      $region50: #{tpu_custom_call.1} parent=5 // pred_check_branch
        %562 = sbr.rel (%p560) target = $region52
      $region51: #{tpu_custom_call.1} parent=5 // pred_region
        %s563 = ssub.s32 %s21, 2
        // Predicated region
        $region53: #{tpu_custom_call.1} parent=51 // pred_check
          %p564 = pneg %p113
        $region54: #{tpu_custom_call.1} parent=51 // pred_check_branch
          %566 = sbr.rel (%p564) target = $region56
        $region55: #{tpu_custom_call.1} parent=51 // pred_region
          %s567 = sand.u32 %s98, 1
          %s568 = scalar_lea.sflag [#allocation4], %s567
          %s569 = sand.u32 %s98, 1
          %s570 = smul.addr %s569, 16
          %s571 = scalar_lea.vmem [#allocation7], %s570
          %572 = dma.done %s568, 256
        $region56: #{tpu_custom_call.1} parent=51 // pred_fallthru
          _
        // Predicated region
        $region57: #{tpu_custom_call.1} parent=51 // pred_check
          %p573 = pneg %p141
        $region58: #{tpu_custom_call.1} parent=51 // pred_check_branch
          %575 = sbr.rel (%p573) target = $region60
        $region59: #{tpu_custom_call.1} parent=51 // pred_region
          %s576 = sand.u32 %s27, 1
          %s577 = scalar_lea.sflag [#allocation9], %s576
          %s578 = sand.u32 %s126, 1
          %s579 = smul.addr %s578, 16
          %s580 = scalar_lea.vmem [#allocation8], %s579
          %581 = dma.done %s577, 256
        $region60: #{tpu_custom_call.1} parent=51 // pred_fallthru
          _
        // Predicated region
        $region61: #{tpu_custom_call.1} parent=51 // pred_check
          %p582 = pneg %p169
        $region62: #{tpu_custom_call.1} parent=51 // pred_check_branch
          %584 = sbr.rel (%p582) target = $region64
        $region63: #{tpu_custom_call.1} parent=51 // pred_region
          %s585 = sand.u32 %s27, 1
          %s586 = scalar_lea.sflag [#allocation9], %s585
          %s587 = sand.u32 %s154, 1
          %s588 = smul.addr %s587, 16
          %s589 = scalar_lea.vmem [#allocation10], %s588
          %590 = dma.done %s586, 256
        $region64: #{tpu_custom_call.1} parent=51 // pred_fallthru
          _
      $region52: #{tpu_custom_call.1} parent=5 // pred_fallthru
        _
    $region6: #{tpu_custom_call.1} parent=1 // loop_footer
      %s25 = sadd.s32 1, %s21
    $region7: #{tpu_custom_call.1} parent=1 // loop_footer_branch
      %20 = sbr.rel target = $region3
    $region8: #{tpu_custom_call.1} parent=1 // loop_exit
      _
    %591 = vsyncpa [#allocation3], 1
    %s592 = scalar_lea.sflag [#allocation3], 1
    %593 = vsyncpa %s592, 1
    %594 = vsyncpa [#allocation6], 1
    %595 = vsyncpa [#allocation4], 1
    %s596 = scalar_lea.sflag [#allocation4], 1
    %597 = vsyncpa %s596, 1
    %598 = vsyncpa [#allocation9], 1
    %s599 = scalar_lea.sflag [#allocation9], 1
    %600 = vsyncpa %s599, 1

</llo_original>
